<compile_context>
chip_gen: v6e
topology: v6e:2x2x1
jax: 0.10.0
libtpu: 0.0.40
codegen_flags: <defaults>
</compile_context>

<pallas_src>
import jax
import jax.numpy as jnp
from jax import lax
from jax.experimental import pallas as pl
from jax.experimental.pallas import tpu as pltpu

IN_FEATURES = 192
HIDDEN = 512
OUT_FEATURES = 576
OUT_PADDED = 640                 # 5 * 128 lanes -> unmasked vector stores
NORM_EPS = 1e-12                 # torch.nn.functional.normalize default eps
DEFAULT_TILE_M = 256             # batch rows per grid step


def _round_up(x, m):
    return ((x + m - 1) // m) * m


def mlp_kernel(x_ref, w1_ref, b1_ref, w2_ref, b2_ref, w3_ref, b3_ref, o_ref):
    # x tile: (TILE_M, 192) f32. Weights are bf16 (VMEM-resident across the
    # whole grid); accumulation is f32 on the MXU; biases are added in f32.
    x = x_ref[...].astype(jnp.float32)

    # F.normalize(x, p=2, dim=1): x / max(||x||_2, eps)
    # == x * rsqrt(max(sum(x^2), eps^2)); rsqrt runs on the EUP slot.
    sumsq = jnp.sum(x * x, axis=-1, keepdims=True)
    inv = lax.rsqrt(jnp.maximum(sumsq, NORM_EPS * NORM_EPS))
    xn = (x * inv).astype(jnp.bfloat16)

    h1 = jnp.dot(xn, w1_ref[...], preferred_element_type=jnp.float32) + b1_ref[...]
    h1 = jnp.maximum(h1, 0.0).astype(jnp.bfloat16)

    h2 = jnp.dot(h1, w2_ref[...], preferred_element_type=jnp.float32) + b2_ref[...]
    h2 = jnp.maximum(h2, 0.0).astype(jnp.bfloat16)

    out = jnp.dot(h2, w3_ref[...], preferred_element_type=jnp.float32) + b3_ref[...]
    o_ref[...] = out.astype(o_ref.dtype)


def neural_network_forward(x, params, *, tile_m=DEFAULT_TILE_M):
    """x: any shape (B, ...) flattening to (B, 192). Returns (B, 576) float32."""
    b = x.shape[0]
    x2d = x.reshape(b, -1).astype(jnp.float32)
    assert x2d.shape[1] == IN_FEATURES, x2d.shape

    w1, b1, w2, b2, w3, b3 = params  # w*: bf16 (in,out); b*: f32 (1,out); w3/b3 padded to 640

    # Tile the batch: multiple of 8 (sublane), capped at tile_m; pad B to a
    # multiple of the tile so the grid divides evenly.  Padded rows are zeros
    # (harmless: they normalize to zero and are sliced away below).
    tile = min(tile_m, max(8, _round_up(b, 8)))
    pad_b = _round_up(b, tile)
    if pad_b != b:
        x2d = jnp.pad(x2d, ((0, pad_b - b), (0, 0)))
    grid = (pad_b // tile,)

    resident = lambda shape: pl.BlockSpec(shape, lambda i: tuple(0 for _ in shape))

    out = pl.pallas_call(
        mlp_kernel,
        out_shape=jax.ShapeDtypeStruct((pad_b, OUT_PADDED), jnp.float32),
        grid_spec=pltpu.PrefetchScalarGridSpec(
            num_scalar_prefetch=0,
            grid=grid,
            in_specs=[
                pl.BlockSpec((tile, IN_FEATURES), lambda i: (i, 0)),   # x: streamed per tile
                resident((IN_FEATURES, HIDDEN)),                       # w1 (bf16)
                resident((1, HIDDEN)),                                 # b1
                resident((HIDDEN, HIDDEN)),                            # w2 (bf16)
                resident((1, HIDDEN)),                                 # b2
                resident((HIDDEN, OUT_PADDED)),                        # w3 (bf16, zero-padded cols)
                resident((1, OUT_PADDED)),                             # b3 (zero-padded cols)
            ],
            out_specs=pl.BlockSpec((tile, OUT_PADDED), lambda i: (i, 0)),
        ),
        compiler_params=pltpu.CompilerParams(
            dimension_semantics=("parallel",),   # shard batch tiles across v7x's 2 TCs
            vmem_limit_bytes=48 << 20,
        ),
    )(x2d, w1, b1, w2, b2, w3, b3)

    return out[:b, :OUT_FEATURES]


def init_params(key):
    """Deterministic init mimicking PyTorch Linear default:
    U(-1/sqrt(fan_in), 1/sqrt(fan_in)) for both weight and bias.
    Weights stored transposed to (in, out) and cast to bf16 (halves weight HBM
    traffic); biases stay f32 as (1, out). The last layer is zero-padded from
    576 to 640 output columns for lane-dense stores."""
    def linear(k, fan_in, fan_out):
        kw, kb = jax.random.split(k)
        bound = 1.0 / (fan_in ** 0.5)
        w = jax.random.uniform(kw, (fan_in, fan_out), jnp.float32, -bound, bound)
        b = jax.random.uniform(kb, (1, fan_out), jnp.float32, -bound, bound)
        return w, b

    k1, k2, k3 = jax.random.split(key, 3)
    w1, b1 = linear(k1, IN_FEATURES, HIDDEN)
    w2, b2 = linear(k2, HIDDEN, HIDDEN)
    w3, b3 = linear(k3, HIDDEN, OUT_FEATURES)

    # Zero-pad the last layer to 640 columns (exactly zero so padded lanes are
    # bias-only garbage that the wrapper slices off).
    w3 = jnp.pad(w3, ((0, 0), (0, OUT_PADDED - OUT_FEATURES)))
    b3 = jnp.pad(b3, ((0, 0), (0, OUT_PADDED - OUT_FEATURES)))

    w1 = w1.astype(jnp.bfloat16)
    w2 = w2.astype(jnp.bfloat16)
    w3 = w3.astype(jnp.bfloat16)
    return (w1, b1, w2, b2, w3, b3)


def reference_forward(x, params):
    """Plain-JAX reference mirroring the kernel math (bf16 matmul inputs,
    f32 accumulation) with PyTorch normalize semantics."""
    w1, b1, w2, b2, w3, b3 = params
    b = x.shape[0]
    x2d = x.reshape(b, -1).astype(jnp.float32)
    norm = jnp.sqrt(jnp.sum(x2d * x2d, axis=-1, keepdims=True))
    x2d = x2d / jnp.maximum(norm, NORM_EPS)
    xb = x2d.astype(jnp.bfloat16)
    h1 = jnp.maximum(jnp.dot(xb, w1, preferred_element_type=jnp.float32) + b1, 0.0)
    h1 = h1.astype(jnp.bfloat16)
    h2 = jnp.maximum(jnp.dot(h1, w2, preferred_element_type=jnp.float32) + b2, 0.0)
    h2 = h2.astype(jnp.bfloat16)
    out = jnp.dot(h2, w3, preferred_element_type=jnp.float32) + b3
    return out[:, :OUT_FEATURES]


if __name__ == "__main__":
    key = jax.random.PRNGKey(0)
    k_x, k_p = jax.random.split(key)

    # Small input that flattens to 192 features: (B=8, C=3, H=8, W=8).
    x = jax.random.normal(k_x, (8, 3, 8, 8), jnp.float32)
    params = init_params(k_p)

    out = neural_network_forward(x, params)
    out = jax.block_until_ready(out)

    ref = reference_forward(x, params)
    assert out.shape == (8, OUT_FEATURES), out.shape
    assert jnp.allclose(out, ref, atol=1e-3, rtol=1e-3), float(jnp.max(jnp.abs(out - ref)))

    print("KERNEL_OK")
</pallas_src>

<mosaic_0001>
module attributes {stable_mosaic.version = 11 : i64} {
  func.func @mlp_kernel(%arg0: i32, %arg1: memref<8x192xf32, #tpu.memory_space<vmem>>, %arg2: memref<192x512xbf16, #tpu.memory_space<vmem>>, %arg3: memref<1x512xf32, #tpu.memory_space<vmem>>, %arg4: memref<512x512xbf16, #tpu.memory_space<vmem>>, %arg5: memref<1x512xf32, #tpu.memory_space<vmem>>, %arg6: memref<512x640xbf16, #tpu.memory_space<vmem>>, %arg7: memref<1x640xf32, #tpu.memory_space<vmem>>, %arg8: memref<8x640xf32, #tpu.memory_space<vmem>>) attributes {dimension_semantics = [#tpu.dimension_semantics<parallel>], iteration_bounds = array<i64: 1>, scalar_prefetch = 0 : i64, scratch_operands = 0 : i64, tpu.core_type = #tpu.core_type<tc>, window_params = [{transform_indices = @transform_0, window_bounds = array<i64: 8, 192>}, {pipeline_mode = #tpu.pipeline_mode<synchronous>, transform_indices = @transform_1, window_bounds = array<i64: 192, 512>}, {pipeline_mode = #tpu.pipeline_mode<synchronous>, transform_indices = @transform_2, window_bounds = array<i64: 1, 512>}, {pipeline_mode = #tpu.pipeline_mode<synchronous>, transform_indices = @transform_3, window_bounds = array<i64: 512, 512>}, {pipeline_mode = #tpu.pipeline_mode<synchronous>, transform_indices = @transform_4, window_bounds = array<i64: 1, 512>}, {pipeline_mode = #tpu.pipeline_mode<synchronous>, transform_indices = @transform_5, window_bounds = array<i64: 512, 640>}, {pipeline_mode = #tpu.pipeline_mode<synchronous>, transform_indices = @transform_6, window_bounds = array<i64: 1, 640>}, {transform_indices = @transform_7, window_bounds = array<i64: 8, 640>}]} {
    %c0 = arith.constant 0 : index
    %c0_0 = arith.constant 0 : index
    %0 = vector.load %arg1[%c0, %c0_0] : memref<8x192xf32, #tpu.memory_space<vmem>>, vector<8x192xf32>
    %1 = arith.mulf %0, %0 : vector<8x192xf32>
    %cst = arith.constant dense<0.000000e+00> : vector<8xf32>
    %2 = vector.multi_reduction <add>, %1, %cst [1] : vector<8x192xf32> to vector<8xf32>
    %3 = vector.shape_cast %2 : vector<8xf32> to vector<8x1xf32>
    %cst_1 = arith.constant 1.000000e-24 : f32
    %4 = vector.broadcast %cst_1 : f32 to vector<8x1xf32>
    %5 = arith.maximumf %3, %4 : vector<8x1xf32>
    %6 = math.rsqrt %5 : vector<8x1xf32>
    %7 = vector.broadcast %6 : vector<8x1xf32> to vector<8x192xf32>
    %8 = arith.mulf %0, %7 : vector<8x192xf32>
    %9 = arith.truncf %8 : vector<8x192xf32> to vector<8x192xbf16>
    %c0_2 = arith.constant 0 : index
    %c0_3 = arith.constant 0 : index
    %10 = vector.load %arg2[%c0_2, %c0_3] : memref<192x512xbf16, #tpu.memory_space<vmem>>, vector<192x512xbf16>
    %cst_4 = arith.constant dense<0.000000e+00> : vector<8x512xf32>
    %11 = tpu.matmul %9, %10, %cst_4 {dimension_numbers = #tpu.dot_dimension_numbers<[1], [0], [0], [1], [0, 0, 1, 1], [], []>} : vector<8x192xbf16>, vector<192x512xbf16>, vector<8x512xf32> -> vector<8x512xf32>
    %c0_5 = arith.constant 0 : index
    %c0_6 = arith.constant 0 : index
    %12 = vector.load %arg3[%c0_5, %c0_6] : memref<1x512xf32, #tpu.memory_space<vmem>>, vector<1x512xf32>
    %13 = vector.broadcast %12 : vector<1x512xf32> to vector<8x512xf32>
    %14 = arith.addf %11, %13 : vector<8x512xf32>
    %cst_7 = arith.constant 0.000000e+00 : f32
    %15 = vector.broadcast %cst_7 : f32 to vector<8x512xf32>
    %16 = arith.maximumf %14, %15 : vector<8x512xf32>
    %17 = arith.truncf %16 : vector<8x512xf32> to vector<8x512xbf16>
    %c0_8 = arith.constant 0 : index
    %c0_9 = arith.constant 0 : index
    %18 = vector.load %arg4[%c0_8, %c0_9] : memref<512x512xbf16, #tpu.memory_space<vmem>>, vector<512x512xbf16>
    %cst_10 = arith.constant dense<0.000000e+00> : vector<8x512xf32>
    %19 = tpu.matmul %17, %18, %cst_10 {dimension_numbers = #tpu.dot_dimension_numbers<[1], [0], [0], [1], [0, 0, 1, 1], [], []>} : vector<8x512xbf16>, vector<512x512xbf16>, vector<8x512xf32> -> vector<8x512xf32>
    %c0_11 = arith.constant 0 : index
    %c0_12 = arith.constant 0 : index
    %20 = vector.load %arg5[%c0_11, %c0_12] : memref<1x512xf32, #tpu.memory_space<vmem>>, vector<1x512xf32>
    %21 = vector.broadcast %20 : vector<1x512xf32> to vector<8x512xf32>
    %22 = arith.addf %19, %21 : vector<8x512xf32>
    %cst_13 = arith.constant 0.000000e+00 : f32
    %23 = vector.broadcast %cst_13 : f32 to vector<8x512xf32>
    %24 = arith.maximumf %22, %23 : vector<8x512xf32>
    %25 = arith.truncf %24 : vector<8x512xf32> to vector<8x512xbf16>
    %c0_14 = arith.constant 0 : index
    %c0_15 = arith.constant 0 : index
    %26 = vector.load %arg6[%c0_14, %c0_15] : memref<512x640xbf16, #tpu.memory_space<vmem>>, vector<512x640xbf16>
    %cst_16 = arith.constant dense<0.000000e+00> : vector<8x640xf32>
    %27 = tpu.matmul %25, %26, %cst_16 {dimension_numbers = #tpu.dot_dimension_numbers<[1], [0], [0], [1], [0, 0, 1, 1], [], []>} : vector<8x512xbf16>, vector<512x640xbf16>, vector<8x640xf32> -> vector<8x640xf32>
    %c0_17 = arith.constant 0 : index
    %c0_18 = arith.constant 0 : index
    %28 = vector.load %arg7[%c0_17, %c0_18] : memref<1x640xf32, #tpu.memory_space<vmem>>, vector<1x640xf32>
    %29 = vector.broadcast %28 : vector<1x640xf32> to vector<8x640xf32>
    %30 = arith.addf %27, %29 : vector<8x640xf32>
    %c0_19 = arith.constant 0 : index
    %c0_20 = arith.constant 0 : index
    %31 = vector.load %arg8[%c0_19, %c0_20] : memref<8x640xf32, #tpu.memory_space<vmem>>, vector<8x640xf32>
    tpu.vector_store %arg8[%c0_19, %c0_20], %30 {strides = array<i32>} : memref<8x640xf32, #tpu.memory_space<vmem>>, vector<8x640xf32>,
    return
  }
  func.func @transform_0(%arg0: i32) -> (i32, i32) {
    %c0_i32 = arith.constant 0 : i32
    %c0_i32_0 = arith.constant 0 : i32
    return %arg0, %c0_i32 : i32, i32
  }
  func.func @transform_1(%arg0: i32) -> (i32, i32) {
    %c0_i32 = arith.constant 0 : i32
    %c0_i32_0 = arith.constant 0 : i32
    %c0_i32_1 = arith.constant 0 : i32
    return %c0_i32, %c0_i32_0 : i32, i32
  }
  func.func @transform_2(%arg0: i32) -> (i32, i32) {
    %c0_i32 = arith.constant 0 : i32
    %c0_i32_0 = arith.constant 0 : i32
    %c0_i32_1 = arith.constant 0 : i32
    return %c0_i32, %c0_i32_0 : i32, i32
  }
  func.func @transform_3(%arg0: i32) -> (i32, i32) {
    %c0_i32 = arith.constant 0 : i32
    %c0_i32_0 = arith.constant 0 : i32
    %c0_i32_1 = arith.constant 0 : i32
    return %c0_i32, %c0_i32_0 : i32, i32
  }
  func.func @transform_4(%arg0: i32) -> (i32, i32) {
    %c0_i32 = arith.constant 0 : i32
    %c0_i32_0 = arith.constant 0 : i32
    %c0_i32_1 = arith.constant 0 : i32
    return %c0_i32, %c0_i32_0 : i32, i32
  }
  func.func @transform_5(%arg0: i32) -> (i32, i32) {
    %c0_i32 = arith.constant 0 : i32
    %c0_i32_0 = arith.constant 0 : i32
    %c0_i32_1 = arith.constant 0 : i32
    return %c0_i32, %c0_i32_0 : i32, i32
  }
  func.func @transform_6(%arg0: i32) -> (i32, i32) {
    %c0_i32 = arith.constant 0 : i32
    %c0_i32_0 = arith.constant 0 : i32
    %c0_i32_1 = arith.constant 0 : i32
    return %c0_i32, %c0_i32_0 : i32, i32
  }
  func.func @transform_7(%arg0: i32) -> (i32, i32) {
    %c0_i32 = arith.constant 0 : i32
    %c0_i32_0 = arith.constant 0 : i32
    return %arg0, %c0_i32 : i32, i32
  }
}

</mosaic_0001>

<llo_original>
// kernel: tpu_custom_call.1
$region0: #{tpu_custom_call.1}
  #allocation0 [shape = 'u32[]', space=smem, size = 0x4, offset = 0x4, fixed_abs, tag = 'smem constant byte address 0x4 - core index']
  #allocation1 [shape = 'u32[144,128]{1,0:T(1,128)}', space=vmem, size = 0x12000, scoped, tag = 'internal scratch']
  %s0 = inlined_call_operand.hbm [shape: f32[8,192], index: 0, kind: input, shape index: {}]
  %s1 = inlined_call_operand.hbm [shape: bf16[192,512], index: 1, kind: input, shape index: {}]
  %s2 = inlined_call_operand.hbm [shape: f32[1,512], index: 2, kind: input, shape index: {}]
  %s3 = inlined_call_operand.hbm [shape: bf16[512,512], index: 3, kind: input, shape index: {}]
  %s4 = inlined_call_operand.vmem [shape: f32[1,512], index: 4, kind: input, shape index: {}]
  %s5 = inlined_call_operand.hbm [shape: bf16[512,640], index: 5, kind: input, shape index: {}]
  %s6 = inlined_call_operand.vmem [shape: f32[1,640], index: 6, kind: input, shape index: {}]
  %s7 = inlined_call_operand.hbm [shape: f32[8,640], index: 7, kind: output, shape index: {}]
  %s8 = sld [smem:[#allocation0]]
  $region58: #{tpu_custom_call.1} parent=0
    _
  %s10 = ssub.s32 1, %s8
  %s11 = scalar_select 0, %s10, %s8
  $region1: #{tpu_custom_call.1} parent=0
    #allocation2 [shape = 'u8[8192]{0}', space=vmem, size = 0x2000, scoped, tag = 'input window, operand 0, single buffered']
    #allocation3 [shape = 's32[1]{0}', space=sflag, size = 0x4, scoped, tag = 'scoped memory for tpu_custom_call.1']
    #allocation4 [shape = 's32[1]{0}', space=sflag, size = 0x4, scoped, tag = 'scoped memory for tpu_custom_call.1']
    #allocation5 [shape = 'u8[196608]{0}', space=vmem, size = 0x30000, scoped, tag = 'input window, operand 1, single buffered']
    #allocation6 [shape = 's32[1]{0}', space=sflag, size = 0x4, scoped, tag = 'scoped memory for tpu_custom_call.1']
    #allocation7 [shape = 'u8[2048]{0}', space=vmem, size = 0x800, scoped, tag = 'input window, operand 2, single buffered']
    #allocation8 [shape = 'u8[524288]{0}', space=vmem, size = 0x80000, scoped, tag = 'input window, operand 3, single buffered']
    #allocation9 [shape = 's32[1]{0}', space=sflag, size = 0x4, scoped, tag = 'scoped memory for tpu_custom_call.1']
    #allocation10 [shape = 'u8[655360]{0}', space=vmem, size = 0xa0000, scoped, tag = 'input window, operand 5, single buffered']
    #allocation11 [shape = 'u8[20480]{0}', space=vmem, size = 0x5000, scoped, tag = 'output window, operand 0, single buffered']
    %12 = vsyncpa [#allocation3], 0
    %13 = vsyncpa [#allocation6], 0
    %14 = vsyncpa [#allocation9], 0
    %15 = vsyncpa [#allocation4], 0
    // Predicated region
    $region2: #{tpu_custom_call.1} parent=1 // pred_check
      _
    $region3: #{tpu_custom_call.1} parent=1 // pred_check_branch
      %17 = sbr.rel (0) target = $region5
    $region4: #{tpu_custom_call.1} parent=1 // pred_region
      %s19 = ssub.s32 256, 256
      %20 = vsyncadd [#allocation3], %s19
      %s22 = sshll.u32 [#allocation2], 4
      %s23 = int_to_ptr.vmem [resolvable:$true] %s22
      %25 = dma.hbm_to_vmem [thread:$0]  %s0, 256, %s23, [#allocation3]
    $region5: #{tpu_custom_call.1} parent=1 // pred_fallthru
      _
    // Predicated region
    $region6: #{tpu_custom_call.1} parent=1 // pred_check
      _
    $region7: #{tpu_custom_call.1} parent=1 // pred_check_branch
      %27 = sbr.rel (0) target = $region9
    $region8: #{tpu_custom_call.1} parent=1 // pred_region
      %s29 = ssub.s32 6144, 6144
      %30 = vsyncadd [#allocation6], %s29
      %s31 = sshll.u32 [#allocation5], 4
      %s32 = int_to_ptr.vmem [resolvable:$true] %s31
      %37 = dma.hbm_to_vmem [thread:$0]  %s1, 6144, %s32, [#allocation6], 256, 256, 16
    $region9: #{tpu_custom_call.1} parent=1 // pred_fallthru
      _
    // Predicated region
    $region10: #{tpu_custom_call.1} parent=1 // pred_check
      _
    $region11: #{tpu_custom_call.1} parent=1 // pred_check_branch
      %39 = sbr.rel (0) target = $region13
    $region12: #{tpu_custom_call.1} parent=1 // pred_region
      %s41 = ssub.s32 64, 64
      %42 = vsyncadd [#allocation6], %s41
      %s44 = sshll.u32 [#allocation7], 4
      %s45 = int_to_ptr.vmem [resolvable:$true] %s44
      %47 = dma.hbm_to_vmem [thread:$0]  %s2, 64, %s45, [#allocation6]
    $region13: #{tpu_custom_call.1} parent=1 // pred_fallthru
      _
    // Predicated region
    $region14: #{tpu_custom_call.1} parent=1 // pred_check
      _
    $region15: #{tpu_custom_call.1} parent=1 // pred_check_branch
      %49 = sbr.rel (0) target = $region17
    $region16: #{tpu_custom_call.1} parent=1 // pred_region
      %s51 = ssub.s32 16384, 16384
      %52 = vsyncadd [#allocation9], %s51
      %s53 = sshll.u32 [#allocation8], 4
      %s54 = int_to_ptr.vmem [resolvable:$true] %s53
      %59 = dma.hbm_to_vmem [thread:$0]  %s3, 16384, %s54, [#allocation9], 256, 256, 16
    $region17: #{tpu_custom_call.1} parent=1 // pred_fallthru
      _
    // Predicated region
    $region18: #{tpu_custom_call.1} parent=1 // pred_check
      _
    $region19: #{tpu_custom_call.1} parent=1 // pred_check_branch
      %61 = sbr.rel (0) target = $region21
    $region20: #{tpu_custom_call.1} parent=1 // pred_region
      _
    $region21: #{tpu_custom_call.1} parent=1 // pred_fallthru
      _
    // Predicated region
    $region22: #{tpu_custom_call.1} parent=1 // pred_check
      _
    $region23: #{tpu_custom_call.1} parent=1 // pred_check_branch
      %63 = sbr.rel (0) target = $region25
    $region24: #{tpu_custom_call.1} parent=1 // pred_region
      %s65 = ssub.s32 20480, 20480
      %66 = vsyncadd [#allocation9], %s65
      %s67 = sshll.u32 [#allocation10], 4
      %s68 = int_to_ptr.vmem [resolvable:$true] %s67
      %73 = dma.hbm_to_vmem [thread:$0]  %s5, 20480, %s68, [#allocation9], 320, 320, 20
    $region25: #{tpu_custom_call.1} parent=1 // pred_fallthru
      _
    // Predicated region
    $region26: #{tpu_custom_call.1} parent=1 // pred_check
      _
    $region27: #{tpu_custom_call.1} parent=1 // pred_check_branch
      %75 = sbr.rel (0) target = $region29
    $region28: #{tpu_custom_call.1} parent=1 // pred_region
      _
    $region29: #{tpu_custom_call.1} parent=1 // pred_fallthru
      _
    // Predicated region
    $region30: #{tpu_custom_call.1} parent=1 // pred_check
      _
    $region31: #{tpu_custom_call.1} parent=1 // pred_check_branch
      %77 = sbr.rel (0) target = $region33
    $region32: #{tpu_custom_call.1} parent=1 // pred_region
      %78 = dma.done [#allocation3], 256
    $region33: #{tpu_custom_call.1} parent=1 // pred_fallthru
      _
    // Predicated region
    $region34: #{tpu_custom_call.1} parent=1 // pred_check
      _
    $region35: #{tpu_custom_call.1} parent=1 // pred_check_branch
      %80 = sbr.rel (0) target = $region37
    $region36: #{tpu_custom_call.1} parent=1 // pred_region
      %81 = dma.done [#allocation6], 6144
    $region37: #{tpu_custom_call.1} parent=1 // pred_fallthru
      _
    // Predicated region
    $region38: #{tpu_custom_call.1} parent=1 // pred_check
      _
    $region39: #{tpu_custom_call.1} parent=1 // pred_check_branch
      %83 = sbr.rel (0) target = $region41
    $region40: #{tpu_custom_call.1} parent=1 // pred_region
      %84 = dma.done [#allocation6], 64
    $region41: #{tpu_custom_call.1} parent=1 // pred_fallthru
      _
    // Predicated region
    $region42: #{tpu_custom_call.1} parent=1 // pred_check
      _
    $region43: #{tpu_custom_call.1} parent=1 // pred_check_branch
      %86 = sbr.rel (0) target = $region45
    $region44: #{tpu_custom_call.1} parent=1 // pred_region
      %87 = dma.done [#allocation9], 16384
    $region45: #{tpu_custom_call.1} parent=1 // pred_fallthru
      _
    // Predicated region
    $region46: #{tpu_custom_call.1} parent=1 // pred_check
      _
    $region47: #{tpu_custom_call.1} parent=1 // pred_check_branch
      %89 = sbr.rel (0) target = $region49
    $region48: #{tpu_custom_call.1} parent=1 // pred_region
      %90 = dma.done [#allocation9], 20480
    $region49: #{tpu_custom_call.1} parent=1 // pred_fallthru
      _
    %v92 = vld [vmem:[#allocation2] sm:$0xff]
    %v93 = vld [vmem:[#allocation2 + $0x8] sm:$0xff]
    %v94 = vmul.f32 %v92, %v92
    %v95 = vmul.f32 %v93, %v93
    %vm96 = vcmask 523264
    %v97 = vsel %vm96, %v95, 0.0
    %v98 = vadd.f32 %v94, %v97
    %99 = vadd.xlane.f32.xlu0 %v98
    %v100 = vpop.xlane.xlu0 %99
    %v101 = vmax.f32 %v100, 1e-24
    %v102 = vrsqrt.pop %v101
    %v103 = vmul.f32 %v92, %v102
    %v104 = vmul.f32 %v93, %v102
    %v105 = vpack.c.bf16 %v103, %v103
    %v106 = vpack.c.bf16 %v104, %v104
    %v107 = vld [vmem:[#allocation5] sm:$0xff]
    %v108 = vld [vmem:[#allocation5 + $0x8] sm:$0xff]
    %v109 = vld [vmem:[#allocation5 + $0x10] sm:$0xff]
    %v110 = vld [vmem:[#allocation5 + $0x18] sm:$0xff]
    %v111 = vld [vmem:[#allocation5 + $0x20] sm:$0xff]
    %v112 = vld [vmem:[#allocation5 + $0x28] sm:$0xff]
    %v113 = vld [vmem:[#allocation5 + $0x30] sm:$0xff]
    %v114 = vld [vmem:[#allocation5 + $0x38] sm:$0xff]
    %v115 = vld [vmem:[#allocation5 + $0x40] sm:$0xff]
    %v116 = vld [vmem:[#allocation5 + $0x48] sm:$0xff]
    %v117 = vld [vmem:[#allocation5 + $0x50] sm:$0xff]
    %v118 = vld [vmem:[#allocation5 + $0x58] sm:$0xff]
    %v119 = vld [vmem:[#allocation5 + $0x60] sm:$0xff]
    %v120 = vld [vmem:[#allocation5 + $0x68] sm:$0xff]
    %v121 = vld [vmem:[#allocation5 + $0x70] sm:$0xff]
    %v122 = vld [vmem:[#allocation5 + $0x78] sm:$0xff]
    %v123 = vld [vmem:[#allocation5 + $0x80] sm:$0xff]
    %v124 = vld [vmem:[#allocation5 + $0x88] sm:$0xff]
    %v125 = vld [vmem:[#allocation5 + $0x90] sm:$0xff]
    %v126 = vld [vmem:[#allocation5 + $0x98] sm:$0xff]
    %v127 = vld [vmem:[#allocation5 + $0xa0] sm:$0xff]
    %v128 = vld [vmem:[#allocation5 + $0xa8] sm:$0xff]
    %v129 = vld [vmem:[#allocation5 + $0xb0] sm:$0xff]
    %v130 = vld [vmem:[#allocation5 + $0xb8] sm:$0xff]
    %v131 = vld [vmem:[#allocation5 + $0xc0] sm:$0xff]
    %v132 = vld [vmem:[#allocation5 + $0xc8] sm:$0xff]
    %v133 = vld [vmem:[#allocation5 + $0xd0] sm:$0xff]
    %v134 = vld [vmem:[#allocation5 + $0xd8] sm:$0xff]
    %v135 = vld [vmem:[#allocation5 + $0xe0] sm:$0xff]
    %v136 = vld [vmem:[#allocation5 + $0xe8] sm:$0xff]
    %v137 = vld [vmem:[#allocation5 + $0xf0] sm:$0xff]
    %v138 = vld [vmem:[#allocation5 + $0xf8] sm:$0xff]
    %v139 = vld [vmem:[#allocation5 + $0x100] sm:$0xff]
    %v140 = vld [vmem:[#allocation5 + $0x108] sm:$0xff]
    %v141 = vld [vmem:[#allocation5 + $0x110] sm:$0xff]
    %v142 = vld [vmem:[#allocation5 + $0x118] sm:$0xff]
    %v143 = vld [vmem:[#allocation5 + $0x120] sm:$0xff]
    %v144 = vld [vmem:[#allocation5 + $0x128] sm:$0xff]
    %v145 = vld [vmem:[#allocation5 + $0x130] sm:$0xff]
    %v146 = vld [vmem:[#allocation5 + $0x138] sm:$0xff]
    %v147 = vld [vmem:[#allocation5 + $0x140] sm:$0xff]
    %v148 = vld [vmem:[#allocation5 + $0x148] sm:$0xff]
    %v149 = vld [vmem:[#allocation5 + $0x150] sm:$0xff]
    %v150 = vld [vmem:[#allocation5 + $0x158] sm:$0xff]
    %v151 = vld [vmem:[#allocation5 + $0x160] sm:$0xff]
    %v152 = vld [vmem:[#allocation5 + $0x168] sm:$0xff]
    %v153 = vld [vmem:[#allocation5 + $0x170] sm:$0xff]
    %v154 = vld [vmem:[#allocation5 + $0x178] sm:$0xff]
    %v155 = vld [vmem:[#allocation7] sm:$0xf]
    %v157 = vlaneseq
    %v158 = vshrl.u32 %v157, 7
    %v159 = vsub.s32 0, %v158
    %v160 = vrot.slane %v155, %v159
    %v161 = vlaneseq
    %v162 = vshrl.u32 %v161, 7
    %v163 = vsub.s32 1, %v162
    %v164 = vrot.slane %v155, %v163
    %v165 = vlaneseq
    %v166 = vshrl.u32 %v165, 7
    %v167 = vsub.s32 2, %v166
    %v168 = vrot.slane %v155, %v167
    %v169 = vlaneseq
    %v170 = vshrl.u32 %v169, 7
    %v171 = vsub.s32 3, %v170
    %v172 = vrot.slane %v155, %v171
    %v225 = vunpack.c.l.b16 %v107
    %v226 = vunpack.c.h.b16 %v107
    %v227 = vunpack.c.l.b16 %v108
    %v228 = vunpack.c.h.b16 %v108
    %v229 = vunpack.c.l.b16 %v109
    %v230 = vunpack.c.h.b16 %v109
    %v231 = vunpack.c.l.b16 %v110
    %v232 = vunpack.c.h.b16 %v110
    %v233 = vunpack.c.l.b16 %v111
    %v234 = vunpack.c.h.b16 %v111
    %v235 = vunpack.c.l.b16 %v112
    %v236 = vunpack.c.h.b16 %v112
    %v237 = vunpack.c.l.b16 %v113
    %v238 = vunpack.c.h.b16 %v113
    %v239 = vunpack.c.l.b16 %v114
    %v240 = vunpack.c.h.b16 %v114
    %v241 = vunpack.c.l.b16 %v115
    %v242 = vunpack.c.h.b16 %v115
    %v243 = vunpack.c.l.b16 %v116
    %v244 = vunpack.c.h.b16 %v116
    %v245 = vunpack.c.l.b16 %v117
    %v246 = vunpack.c.h.b16 %v117
    %v247 = vunpack.c.l.b16 %v118
    %v248 = vunpack.c.h.b16 %v118
    %v249 = vunpack.c.l.b16 %v119
    %v250 = vunpack.c.h.b16 %v119
    %v251 = vunpack.c.l.b16 %v120
    %v252 = vunpack.c.h.b16 %v120
    %v253 = vunpack.c.l.b16 %v121
    %v254 = vunpack.c.h.b16 %v121
    %v255 = vunpack.c.l.b16 %v122
    %v256 = vunpack.c.h.b16 %v122
    %v257 = vunpack.c.l.b16 %v123
    %v258 = vunpack.c.h.b16 %v123
    %v259 = vunpack.c.l.b16 %v124
    %v260 = vunpack.c.h.b16 %v124
    %v261 = vunpack.c.l.b16 %v125
    %v262 = vunpack.c.h.b16 %v125
    %v263 = vunpack.c.l.b16 %v126
    %v264 = vunpack.c.h.b16 %v126
    %v265 = vunpack.c.l.b16 %v127
    %v266 = vunpack.c.h.b16 %v127
    %v267 = vunpack.c.l.b16 %v128
    %v268 = vunpack.c.h.b16 %v128
    %v269 = vunpack.c.l.b16 %v129
    %v270 = vunpack.c.h.b16 %v129
    %v271 = vunpack.c.l.b16 %v130
    %v272 = vunpack.c.h.b16 %v130
    %v273 = vunpack.c.l.b16 %v131
    %v274 = vunpack.c.h.b16 %v131
    %v275 = vunpack.c.l.b16 %v132
    %v276 = vunpack.c.h.b16 %v132
    %v277 = vunpack.c.l.b16 %v133
    %v278 = vunpack.c.h.b16 %v133
    %v279 = vunpack.c.l.b16 %v134
    %v280 = vunpack.c.h.b16 %v134
    %v281 = vunpack.c.l.b16 %v135
    %v282 = vunpack.c.h.b16 %v135
    %v283 = vunpack.c.l.b16 %v136
    %v284 = vunpack.c.h.b16 %v136
    %v285 = vunpack.c.l.b16 %v137
    %v286 = vunpack.c.h.b16 %v137
    %v287 = vunpack.c.l.b16 %v138
    %v288 = vunpack.c.h.b16 %v138
    %v289 = vunpack.c.l.b16 %v139
    %v290 = vunpack.c.h.b16 %v139
    %v291 = vunpack.c.l.b16 %v140
    %v292 = vunpack.c.h.b16 %v140
    %v293 = vunpack.c.l.b16 %v141
    %v294 = vunpack.c.h.b16 %v141
    %v295 = vunpack.c.l.b16 %v142
    %v296 = vunpack.c.h.b16 %v142
    %v297 = vunpack.c.l.b16 %v143
    %v298 = vunpack.c.h.b16 %v143
    %v299 = vunpack.c.l.b16 %v144
    %v300 = vunpack.c.h.b16 %v144
    %v301 = vunpack.c.l.b16 %v145
    %v302 = vunpack.c.h.b16 %v145
    %v303 = vunpack.c.l.b16 %v146
    %v304 = vunpack.c.h.b16 %v146
    %v305 = vunpack.c.l.b16 %v147
    %v306 = vunpack.c.h.b16 %v147
    %v307 = vunpack.c.l.b16 %v148
    %v308 = vunpack.c.h.b16 %v148
    %v309 = vunpack.c.l.b16 %v149
    %v310 = vunpack.c.h.b16 %v149
    %v311 = vunpack.c.l.b16 %v150
    %v312 = vunpack.c.h.b16 %v150
    %v313 = vunpack.c.l.b16 %v151
    %v314 = vunpack.c.h.b16 %v151
    %v315 = vunpack.c.l.b16 %v152
    %v316 = vunpack.c.h.b16 %v152
    %v317 = vunpack.c.l.b16 %v153
    %v318 = vunpack.c.h.b16 %v153
    %v319 = vunpack.c.l.b16 %v154
    %v320 = vunpack.c.h.b16 %v154
    %v321 = vpack.c.b16 %v229, %v225
    %v322 = vpack.c.b16 %v230, %v226
    %v323 = vpack.c.b16 %v231, %v227
    %v324 = vpack.c.b16 %v232, %v228
    %v325 = vpack.c.b16 %v237, %v233
    %v326 = vpack.c.b16 %v238, %v234
    %v327 = vpack.c.b16 %v239, %v235
    %v328 = vpack.c.b16 %v240, %v236
    %v329 = vpack.c.b16 %v245, %v241
    %v330 = vpack.c.b16 %v246, %v242
    %v331 = vpack.c.b16 %v247, %v243
    %v332 = vpack.c.b16 %v248, %v244
    %v333 = vpack.c.b16 %v253, %v249
    %v334 = vpack.c.b16 %v254, %v250
    %v335 = vpack.c.b16 %v255, %v251
    %v336 = vpack.c.b16 %v256, %v252
    %v337 = vpack.c.b16 %v261, %v257
    %v338 = vpack.c.b16 %v262, %v258
    %v339 = vpack.c.b16 %v263, %v259
    %v340 = vpack.c.b16 %v264, %v260
    %v341 = vpack.c.b16 %v269, %v265
    %v342 = vpack.c.b16 %v270, %v266
    %v343 = vpack.c.b16 %v271, %v267
    %v344 = vpack.c.b16 %v272, %v268
    %v345 = vpack.c.b16 %v277, %v273
    %v346 = vpack.c.b16 %v278, %v274
    %v347 = vpack.c.b16 %v279, %v275
    %v348 = vpack.c.b16 %v280, %v276
    %v349 = vpack.c.b16 %v285, %v281
    %v350 = vpack.c.b16 %v286, %v282
    %v351 = vpack.c.b16 %v287, %v283
    %v352 = vpack.c.b16 %v288, %v284
    %v353 = vpack.c.b16 %v293, %v289
    %v354 = vpack.c.b16 %v294, %v290
    %v355 = vpack.c.b16 %v295, %v291
    %v356 = vpack.c.b16 %v296, %v292
    %v357 = vpack.c.b16 %v301, %v297
    %v358 = vpack.c.b16 %v302, %v298
    %v359 = vpack.c.b16 %v303, %v299
    %v360 = vpack.c.b16 %v304, %v300
    %v361 = vpack.c.b16 %v309, %v305
    %v362 = vpack.c.b16 %v310, %v306
    %v363 = vpack.c.b16 %v311, %v307
    %v364 = vpack.c.b16 %v312, %v308
    %v365 = vpack.c.b16 %v317, %v313
    %v366 = vpack.c.b16 %v318, %v314
    %v367 = vpack.c.b16 %v319, %v315
    %v368 = vpack.c.b16 %v320, %v316
    %v418 = vsel %vm96, %v106, 0
    %420 = vmatprep.subr.bf16.mxu0 %v350
    %421 = vmatpush1.bf16.msra.mxu0 %v349
    %422 = vmatprep.subr.bf16.mxu0 %v346
    %423 = vmatpush1.bf16.msra.mxu0 %v345
    %424 = vmatprep.subr.bf16.mxu0 %v342
    %425 = vmatpush1.bf16.msra.mxu0 %v341
    %426 = vmatprep.subr.bf16.mxu0 %v338
    %427 = vmatpush1.bf16.msra.mxu0 %v337
    %428 = vmatprep.subr.bf16.mxu0 %v334
    %429 = vmatpush1.bf16.msra.mxu0 %v333
    %430 = vmatprep.subr.bf16.mxu0 %v330
    %431 = vmatpush1.bf16.msra.mxu0 %v329
    %432 = vmatprep.subr.bf16.mxu0 %v326
    %433 = vmatpush1.bf16.msra.mxu0 %v325
    %434 = vmatprep.subr.bf16.mxu0 %v322
    %435 = vmatpush1.bf16.msra.mxu0 %v321
    %436 = vmatprep.subr.bf16.mxu0 0
    %437 = vmatpush2.bf16.msra.mxu0 0
    %438 = vmatprep.subr.bf16.mxu0 0
    %439 = vmatpush2.bf16.msra.mxu0 0
    %440 = vmatprep.subr.bf16.mxu0 0
    %441 = vmatpush2.bf16.msra.mxu0 0
    %442 = vmatprep.subr.bf16.mxu0 0
    %443 = vmatpush2.bf16.msra.mxu0 0
    %444 = vmatprep.subr.bf16.mxu0 %v366
    %445 = vmatpush2.bf16.msra.mxu0 %v365
    %446 = vmatprep.subr.bf16.mxu0 %v362
    %447 = vmatpush2.bf16.msra.mxu0 %v361
    %448 = vmatprep.subr.bf16.mxu0 %v358
    %449 = vmatpush2.bf16.msra.mxu0 %v357
    %450 = vmatprep.subr.bf16.mxu0 %v354
    %451 = vmatpush2.bf16.msra.mxu0 %v353
    %452 = vmatprep.mubr.bf16.mxu0 %v418
    %453 = vmatmul.mubr.bf16.gmra.mxu0 %v105
    %v454 = vpop.f32.mrf.mxu0
    %v455 = vadd.f32 %v160, %v454
    %v456 = vpop.f32.mrf.mxu0
    %v457 = vadd.f32 %v164, %v456
    %v458 = vpop.f32.mrf.mxu0
    %v459 = vpop.f32.mrf.mxu0
    %460 = vdwg.mxu0
    %461 = vmatprep.subr.bf16.mxu0 %v352
    %462 = vmatpush1.bf16.msra.mxu0 %v351
    %463 = vmatprep.subr.bf16.mxu0 %v348
    %464 = vmatpush1.bf16.msra.mxu0 %v347
    %465 = vmatprep.subr.bf16.mxu0 %v344
    %466 = vmatpush1.bf16.msra.mxu0 %v343
    %467 = vmatprep.subr.bf16.mxu0 %v340
    %468 = vmatpush1.bf16.msra.mxu0 %v339
    %469 = vmatprep.subr.bf16.mxu0 %v336
    %470 = vmatpush1.bf16.msra.mxu0 %v335
    %471 = vmatprep.subr.bf16.mxu0 %v332
    %472 = vmatpush1.bf16.msra.mxu0 %v331
    %473 = vmatprep.subr.bf16.mxu0 %v328
    %474 = vmatpush1.bf16.msra.mxu0 %v327
    %475 = vmatprep.subr.bf16.mxu0 %v324
    %476 = vmatpush1.bf16.msra.mxu0 %v323
    %477 = vmatprep.subr.bf16.mxu0 0
    %478 = vmatpush2.bf16.msra.mxu0 0
    %479 = vmatprep.subr.bf16.mxu0 0
    %480 = vmatpush2.bf16.msra.mxu0 0
    %481 = vmatprep.subr.bf16.mxu0 0
    %482 = vmatpush2.bf16.msra.mxu0 0
    %483 = vmatprep.subr.bf16.mxu0 0
    %484 = vmatpush2.bf16.msra.mxu0 0
    %485 = vmatprep.subr.bf16.mxu0 %v368
    %486 = vmatpush2.bf16.msra.mxu0 %v367
    %487 = vmatprep.subr.bf16.mxu0 %v364
    %488 = vmatpush2.bf16.msra.mxu0 %v363
    %489 = vmatprep.subr.bf16.mxu0 %v360
    %490 = vmatpush2.bf16.msra.mxu0 %v359
    %491 = vmatprep.subr.bf16.mxu0 %v356
    %492 = vmatpush2.bf16.msra.mxu0 %v355
    %493 = vmatprep.mubr.bf16.mxu0 %v418
    %494 = vmatmul.mubr.bf16.gmra.mxu0 %v105
    %v495 = vpop.f32.mrf.mxu0
    %v496 = vadd.f32 %v168, %v495
    %v497 = vpop.f32.mrf.mxu0
    %v498 = vadd.f32 %v172, %v497
    %v499 = vpop.f32.mrf.mxu0
    %v500 = vpop.f32.mrf.mxu0
    %501 = vdwg.mxu0
    %v502 = vmax.f32 %v455, 0.0
    %v503 = vmax.f32 %v457, 0.0
    %v504 = vmax.f32 %v496, 0.0
    %v505 = vmax.f32 %v498, 0.0
    %v506 = vpack.c.bf16 %v502, %v502
    %v507 = vpack.c.bf16 %v503, %v503
    %v508 = vpack.c.bf16 %v504, %v504
    %v509 = vpack.c.bf16 %v505, %v505
    %v510 = vld [vmem:[#allocation8] sm:$0xff]
    %v511 = vld [vmem:[#allocation8 + $0x8] sm:$0xff]
    %v512 = vld [vmem:[#allocation8 + $0x10] sm:$0xff]
    %v513 = vld [vmem:[#allocation8 + $0x18] sm:$0xff]
    %v514 = vld [vmem:[#allocation8 + $0x20] sm:$0xff]
    %v515 = vld [vmem:[#allocation8 + $0x28] sm:$0xff]
    %v516 = vld [vmem:[#allocation8 + $0x30] sm:$0xff]
    %v517 = vld [vmem:[#allocation8 + $0x38] sm:$0xff]
    %v518 = vld [vmem:[#allocation8 + $0x40] sm:$0xff]
    %v519 = vld [vmem:[#allocation8 + $0x48] sm:$0xff]
    %v520 = vld [vmem:[#allocation8 + $0x50] sm:$0xff]
    %v521 = vld [vmem:[#allocation8 + $0x58] sm:$0xff]
    %v522 = vld [vmem:[#allocation8 + $0x60] sm:$0xff]
    %v523 = vld [vmem:[#allocation8 + $0x68] sm:$0xff]
    %v524 = vld [vmem:[#allocation8 + $0x70] sm:$0xff]
    %v525 = vld [vmem:[#allocation8 + $0x78] sm:$0xff]
    %v526 = vld [vmem:[#allocation8 + $0x80] sm:$0xff]
    %v527 = vld [vmem:[#allocation8 + $0x88] sm:$0xff]
    %v528 = vld [vmem:[#allocation8 + $0x90] sm:$0xff]
    %v529 = vld [vmem:[#allocation8 + $0x98] sm:$0xff]
    %v530 = vld [vmem:[#allocation8 + $0xa0] sm:$0xff]
    %v531 = vld [vmem:[#allocation8 + $0xa8] sm:$0xff]
    %v532 = vld [vmem:[#allocation8 + $0xb0] sm:$0xff]
    %v533 = vld [vmem:[#allocation8 + $0xb8] sm:$0xff]
    %v534 = vld [vmem:[#allocation8 + $0xc0] sm:$0xff]
    %v535 = vld [vmem:[#allocation8 + $0xc8] sm:$0xff]
    %v536 = vld [vmem:[#allocation8 + $0xd0] sm:$0xff]
    %v537 = vld [vmem:[#allocation8 + $0xd8] sm:$0xff]
    %v538 = vld [vmem:[#allocation8 + $0xe0] sm:$0xff]
    %v539 = vld [vmem:[#allocation8 + $0xe8] sm:$0xff]
    %v540 = vld [vmem:[#allocation8 + $0xf0] sm:$0xff]
    %v541 = vld [vmem:[#allocation8 + $0xf8] sm:$0xff]
    %v542 = vld [vmem:[#allocation8 + $0x100] sm:$0xff]
    %v543 = vld [vmem:[#allocation8 + $0x108] sm:$0xff]
    %v544 = vld [vmem:[#allocation8 + $0x110] sm:$0xff]
    %v545 = vld [vmem:[#allocation8 + $0x118] sm:$0xff]
    %v546 = vld [vmem:[#allocation8 + $0x120] sm:$0xff]
    %v547 = vld [vmem:[#allocation8 + $0x128] sm:$0xff]
    %v548 = vld [vmem:[#allocation8 + $0x130] sm:$0xff]
    %v549 = vld [vmem:[#allocation8 + $0x138] sm:$0xff]
    %v550 = vld [vmem:[#allocation8 + $0x140] sm:$0xff]
    %v551 = vld [vmem:[#allocation8 + $0x148] sm:$0xff]
    %v552 = vld [vmem:[#allocation8 + $0x150] sm:$0xff]
    %v553 = vld [vmem:[#allocation8 + $0x158] sm:$0xff]
    %v554 = vld [vmem:[#allocation8 + $0x160] sm:$0xff]
    %v555 = vld [vmem:[#allocation8 + $0x168] sm:$0xff]
    %v556 = vld [vmem:[#allocation8 + $0x170] sm:$0xff]
    %v557 = vld [vmem:[#allocation8 + $0x178] sm:$0xff]
    %v558 = vld [vmem:[#allocation8 + $0x180] sm:$0xff]
    %v559 = vld [vmem:[#allocation8 + $0x188] sm:$0xff]
    %v560 = vld [vmem:[#allocation8 + $0x190] sm:$0xff]
    %v561 = vld [vmem:[#allocation8 + $0x198] sm:$0xff]
    %v562 = vld [vmem:[#allocation8 + $0x1a0] sm:$0xff]
    %v563 = vld [vmem:[#allocation8 + $0x1a8] sm:$0xff]
    %v564 = vld [vmem:[#allocation8 + $0x1b0] sm:$0xff]
    %v565 = vld [vmem:[#allocation8 + $0x1b8] sm:$0xff]
    %v566 = vld [vmem:[#allocation8 + $0x1c0] sm:$0xff]
    %v567 = vld [vmem:[#allocation8 + $0x1c8] sm:$0xff]
    %v568 = vld [vmem:[#allocation8 + $0x1d0] sm:$0xff]
    %v569 = vld [vmem:[#allocation8 + $0x1d8] sm:$0xff]
    %v570 = vld [vmem:[#allocation8 + $0x1e0] sm:$0xff]
    %v571 = vld [vmem:[#allocation8 + $0x1e8] sm:$0xff]
    %v572 = vld [vmem:[#allocation8 + $0x1f0] sm:$0xff]
    %v573 = vld [vmem:[#allocation8 + $0x1f8] sm:$0xff]
    %v574 = vld [vmem:[#allocation8 + $0x200] sm:$0xff]
    %v575 = vld [vmem:[#allocation8 + $0x208] sm:$0xff]
    %v576 = vld [vmem:[#allocation8 + $0x210] sm:$0xff]
    %v577 = vld [vmem:[#allocation8 + $0x218] sm:$0xff]
    %v578 = vld [vmem:[#allocation8 + $0x220] sm:$0xff]
    %v579 = vld [vmem:[#allocation8 + $0x228] sm:$0xff]
    %v580 = vld [vmem:[#allocation8 + $0x230] sm:$0xff]
    %v581 = vld [vmem:[#allocation8 + $0x238] sm:$0xff]
    %v582 = vld [vmem:[#allocation8 + $0x240] sm:$0xff]
    %v583 = vld [vmem:[#allocation8 + $0x248] sm:$0xff]
    %v584 = vld [vmem:[#allocation8 + $0x250] sm:$0xff]
    %v585 = vld [vmem:[#allocation8 + $0x258] sm:$0xff]
    %v586 = vld [vmem:[#allocation8 + $0x260] sm:$0xff]
    %v587 = vld [vmem:[#allocation8 + $0x268] sm:$0xff]
    %v588 = vld [vmem:[#allocation8 + $0x270] sm:$0xff]
    %v589 = vld [vmem:[#allocation8 + $0x278] sm:$0xff]
    %v590 = vld [vmem:[#allocation8 + $0x280] sm:$0xff]
    %v591 = vld [vmem:[#allocation8 + $0x288] sm:$0xff]
    %v592 = vld [vmem:[#allocation8 + $0x290] sm:$0xff]
    %v593 = vld [vmem:[#allocation8 + $0x298] sm:$0xff]
    %v594 = vld [vmem:[#allocation8 + $0x2a0] sm:$0xff]
    %v595 = vld [vmem:[#allocation8 + $0x2a8] sm:$0xff]
    %v596 = vld [vmem:[#allocation8 + $0x2b0] sm:$0xff]
    %v597 = vld [vmem:[#allocation8 + $0x2b8] sm:$0xff]
    %v598 = vld [vmem:[#allocation8 + $0x2c0] sm:$0xff]
    %v599 = vld [vmem:[#allocation8 + $0x2c8] sm:$0xff]
    %v600 = vld [vmem:[#allocation8 + $0x2d0] sm:$0xff]
    %v601 = vld [vmem:[#allocation8 + $0x2d8] sm:$0xff]
    %v602 = vld [vmem:[#allocation8 + $0x2e0] sm:$0xff]
    %v603 = vld [vmem:[#allocation8 + $0x2e8] sm:$0xff]
    %v604 = vld [vmem:[#allocation8 + $0x2f0] sm:$0xff]
    %v605 = vld [vmem:[#allocation8 + $0x2f8] sm:$0xff]
    %v606 = vld [vmem:[#allocation8 + $0x300] sm:$0xff]
    %v607 = vld [vmem:[#allocation8 + $0x308] sm:$0xff]
    %v608 = vld [vmem:[#allocation8 + $0x310] sm:$0xff]
    %v609 = vld [vmem:[#allocation8 + $0x318] sm:$0xff]
    %v610 = vld [vmem:[#allocation8 + $0x320] sm:$0xff]
    %v611 = vld [vmem:[#allocation8 + $0x328] sm:$0xff]
    %v612 = vld [vmem:[#allocation8 + $0x330] sm:$0xff]
    %v613 = vld [vmem:[#allocation8 + $0x338] sm:$0xff]
    %v614 = vld [vmem:[#allocation8 + $0x340] sm:$0xff]
    %v615 = vld [vmem:[#allocation8 + $0x348] sm:$0xff]
    %v616 = vld [vmem:[#allocation8 + $0x350] sm:$0xff]
    %v617 = vld [vmem:[#allocation8 + $0x358] sm:$0xff]
    %v618 = vld [vmem:[#allocation8 + $0x360] sm:$0xff]
    %v619 = vld [vmem:[#allocation8 + $0x368] sm:$0xff]
    %v620 = vld [vmem:[#allocation8 + $0x370] sm:$0xff]
    %v621 = vld [vmem:[#allocation8 + $0x378] sm:$0xff]
    %v622 = vld [vmem:[#allocation8 + $0x380] sm:$0xff]
    %v623 = vld [vmem:[#allocation8 + $0x388] sm:$0xff]
    %v624 = vld [vmem:[#allocation8 + $0x390] sm:$0xff]
    %v625 = vld [vmem:[#allocation8 + $0x398] sm:$0xff]
    %v626 = vld [vmem:[#allocation8 + $0x3a0] sm:$0xff]
    %v627 = vld [vmem:[#allocation8 + $0x3a8] sm:$0xff]
    %v628 = vld [vmem:[#allocation8 + $0x3b0] sm:$0xff]
    %v629 = vld [vmem:[#allocation8 + $0x3b8] sm:$0xff]
    %v630 = vld [vmem:[#allocation8 + $0x3c0] sm:$0xff]
    %v631 = vld [vmem:[#allocation8 + $0x3c8] sm:$0xff]
    %v632 = vld [vmem:[#allocation8 + $0x3d0] sm:$0xff]
    %v633 = vld [vmem:[#allocation8 + $0x3d8] sm:$0xff]
    %v634 = vld [vmem:[#allocation8 + $0x3e0] sm:$0xff]
    %v635 = vld [vmem:[#allocation8 + $0x3e8] sm:$0xff]
    %v636 = vld [vmem:[#allocation8 + $0x3f0] sm:$0xff]
    %v637 = vld [vmem:[#allocation8 + $0x3f8] sm:$0xff]
    %v638 = vld [vmem:[%s4] sm:$0xf]
    %v640 = vlaneseq
    %v641 = vshrl.u32 %v640, 7
    %v642 = vsub.s32 0, %v641
    %v643 = vrot.slane %v638, %v642
    %v644 = vlaneseq
    %v645 = vshrl.u32 %v644, 7
    %v646 = vsub.s32 1, %v645
    %v647 = vrot.slane %v638, %v646
    %v648 = vlaneseq
    %v649 = vshrl.u32 %v648, 7
    %v650 = vsub.s32 2, %v649
    %v651 = vrot.slane %v638, %v650
    %v652 = vlaneseq
    %v653 = vshrl.u32 %v652, 7
    %v654 = vsub.s32 3, %v653
    %v655 = vrot.slane %v638, %v654
    %v788 = vunpack.c.l.b16 %v510
    %v789 = vunpack.c.h.b16 %v510
    %v790 = vunpack.c.l.b16 %v511
    %v791 = vunpack.c.h.b16 %v511
    %v792 = vunpack.c.l.b16 %v512
    %v793 = vunpack.c.h.b16 %v512
    %v794 = vunpack.c.l.b16 %v513
    %v795 = vunpack.c.h.b16 %v513
    %v796 = vunpack.c.l.b16 %v514
    %v797 = vunpack.c.h.b16 %v514
    %v798 = vunpack.c.l.b16 %v515
    %v799 = vunpack.c.h.b16 %v515
    %v800 = vunpack.c.l.b16 %v516
    %v801 = vunpack.c.h.b16 %v516
    %v802 = vunpack.c.l.b16 %v517
    %v803 = vunpack.c.h.b16 %v517
    %v804 = vunpack.c.l.b16 %v518
    %v805 = vunpack.c.h.b16 %v518
    %v806 = vunpack.c.l.b16 %v519
    %v807 = vunpack.c.h.b16 %v519
    %v808 = vunpack.c.l.b16 %v520
    %v809 = vunpack.c.h.b16 %v520
    %v810 = vunpack.c.l.b16 %v521
    %v811 = vunpack.c.h.b16 %v521
    %v812 = vunpack.c.l.b16 %v522
    %v813 = vunpack.c.h.b16 %v522
    %v814 = vunpack.c.l.b16 %v523
    %v815 = vunpack.c.h.b16 %v523
    %v816 = vunpack.c.l.b16 %v524
    %v817 = vunpack.c.h.b16 %v524
    %v818 = vunpack.c.l.b16 %v525
    %v819 = vunpack.c.h.b16 %v525
    %v820 = vunpack.c.l.b16 %v526
    %v821 = vunpack.c.h.b16 %v526
    %v822 = vunpack.c.l.b16 %v527
    %v823 = vunpack.c.h.b16 %v527
    %v824 = vunpack.c.l.b16 %v528
    %v825 = vunpack.c.h.b16 %v528
    %v826 = vunpack.c.l.b16 %v529
    %v827 = vunpack.c.h.b16 %v529
    %v828 = vunpack.c.l.b16 %v530
    %v829 = vunpack.c.h.b16 %v530
    %v830 = vunpack.c.l.b16 %v531
    %v831 = vunpack.c.h.b16 %v531
    %v832 = vunpack.c.l.b16 %v532
    %v833 = vunpack.c.h.b16 %v532
    %v834 = vunpack.c.l.b16 %v533
    %v835 = vunpack.c.h.b16 %v533
    %v836 = vunpack.c.l.b16 %v534
    %v837 = vunpack.c.h.b16 %v534
    %v838 = vunpack.c.l.b16 %v535
    %v839 = vunpack.c.h.b16 %v535
    %v840 = vunpack.c.l.b16 %v536
    %v841 = vunpack.c.h.b16 %v536
    %v842 = vunpack.c.l.b16 %v537
    %v843 = vunpack.c.h.b16 %v537
    %v844 = vunpack.c.l.b16 %v538
    %v845 = vunpack.c.h.b16 %v538
    %v846 = vunpack.c.l.b16 %v539
    %v847 = vunpack.c.h.b16 %v539
    %v848 = vunpack.c.l.b16 %v540
    %v849 = vunpack.c.h.b16 %v540
    %v850 = vunpack.c.l.b16 %v541
    %v851 = vunpack.c.h.b16 %v541
    %v852 = vunpack.c.l.b16 %v542
    %v853 = vunpack.c.h.b16 %v542
    %v854 = vunpack.c.l.b16 %v543
    %v855 = vunpack.c.h.b16 %v543
    %v856 = vunpack.c.l.b16 %v544
    %v857 = vunpack.c.h.b16 %v544
    %v858 = vunpack.c.l.b16 %v545
    %v859 = vunpack.c.h.b16 %v545
    %v860 = vunpack.c.l.b16 %v546
    %v861 = vunpack.c.h.b16 %v546
    %v862 = vunpack.c.l.b16 %v547
    %v863 = vunpack.c.h.b16 %v547
    %v864 = vunpack.c.l.b16 %v548
    %v865 = vunpack.c.h.b16 %v548
    %v866 = vunpack.c.l.b16 %v549
    %v867 = vunpack.c.h.b16 %v549
    %v868 = vunpack.c.l.b16 %v550
    %v869 = vunpack.c.h.b16 %v550
    %v870 = vunpack.c.l.b16 %v551
    %v871 = vunpack.c.h.b16 %v551
    %v872 = vunpack.c.l.b16 %v552
    %v873 = vunpack.c.h.b16 %v552
    %v874 = vunpack.c.l.b16 %v553
    %v875 = vunpack.c.h.b16 %v553
    %v876 = vunpack.c.l.b16 %v554
    %v877 = vunpack.c.h.b16 %v554
    %v878 = vunpack.c.l.b16 %v555
    %v879 = vunpack.c.h.b16 %v555
    %v880 = vunpack.c.l.b16 %v556
    %v881 = vunpack.c.h.b16 %v556
    %v882 = vunpack.c.l.b16 %v557
    %v883 = vunpack.c.h.b16 %v557
    %v884 = vunpack.c.l.b16 %v558
    %v885 = vunpack.c.h.b16 %v558
    %v886 = vunpack.c.l.b16 %v559
    %v887 = vunpack.c.h.b16 %v559
    %v888 = vunpack.c.l.b16 %v560
    %v889 = vunpack.c.h.b16 %v560
    %v890 = vunpack.c.l.b16 %v561
    %v891 = vunpack.c.h.b16 %v561
    %v892 = vunpack.c.l.b16 %v562
    %v893 = vunpack.c.h.b16 %v562
    %v894 = vunpack.c.l.b16 %v563
    %v895 = vunpack.c.h.b16 %v563
    %v896 = vunpack.c.l.b16 %v564
    %v897 = vunpack.c.h.b16 %v564
    %v898 = vunpack.c.l.b16 %v565
    %v899 = vunpack.c.h.b16 %v565
    %v900 = vunpack.c.l.b16 %v566
    %v901 = vunpack.c.h.b16 %v566
    %v902 = vunpack.c.l.b16 %v567
    %v903 = vunpack.c.h.b16 %v567
    %v904 = vunpack.c.l.b16 %v568
    %v905 = vunpack.c.h.b16 %v568
    %v906 = vunpack.c.l.b16 %v569
    %v907 = vunpack.c.h.b16 %v569
    %v908 = vunpack.c.l.b16 %v570
    %v909 = vunpack.c.h.b16 %v570
    %v910 = vunpack.c.l.b16 %v571
    %v911 = vunpack.c.h.b16 %v571
    %v912 = vunpack.c.l.b16 %v572
    %v913 = vunpack.c.h.b16 %v572
    %v914 = vunpack.c.l.b16 %v573
    %v915 = vunpack.c.h.b16 %v573
    %v916 = vunpack.c.l.b16 %v574
    %v917 = vunpack.c.h.b16 %v574
    %v918 = vunpack.c.l.b16 %v575
    %v919 = vunpack.c.h.b16 %v575
    %v920 = vunpack.c.l.b16 %v576
    %v921 = vunpack.c.h.b16 %v576
    %v922 = vunpack.c.l.b16 %v577
    %v923 = vunpack.c.h.b16 %v577
    %v924 = vunpack.c.l.b16 %v578
    %v925 = vunpack.c.h.b16 %v578
    %v926 = vunpack.c.l.b16 %v579
    %v927 = vunpack.c.h.b16 %v579
    %v928 = vunpack.c.l.b16 %v580
    %v929 = vunpack.c.h.b16 %v580
    %v930 = vunpack.c.l.b16 %v581
    %v931 = vunpack.c.h.b16 %v581
    %v932 = vunpack.c.l.b16 %v582
    %v933 = vunpack.c.h.b16 %v582
    %v934 = vunpack.c.l.b16 %v583
    %v935 = vunpack.c.h.b16 %v583
    %v936 = vunpack.c.l.b16 %v584
    %v937 = vunpack.c.h.b16 %v584
    %v938 = vunpack.c.l.b16 %v585
    %v939 = vunpack.c.h.b16 %v585
    %v940 = vunpack.c.l.b16 %v586
    %v941 = vunpack.c.h.b16 %v586
    %v942 = vunpack.c.l.b16 %v587
    %v943 = vunpack.c.h.b16 %v587
    %v944 = vunpack.c.l.b16 %v588
    %v945 = vunpack.c.h.b16 %v588
    %v946 = vunpack.c.l.b16 %v589
    %v947 = vunpack.c.h.b16 %v589
    %v948 = vunpack.c.l.b16 %v590
    %v949 = vunpack.c.h.b16 %v590
    %v950 = vunpack.c.l.b16 %v591
    %v951 = vunpack.c.h.b16 %v591
    %v952 = vunpack.c.l.b16 %v592
    %v953 = vunpack.c.h.b16 %v592
    %v954 = vunpack.c.l.b16 %v593
    %v955 = vunpack.c.h.b16 %v593
    %v956 = vunpack.c.l.b16 %v594
    %v957 = vunpack.c.h.b16 %v594
    %v958 = vunpack.c.l.b16 %v595
    %v959 = vunpack.c.h.b16 %v595
    %v960 = vunpack.c.l.b16 %v596
    %v961 = vunpack.c.h.b16 %v596
    %v962 = vunpack.c.l.b16 %v597
    %v963 = vunpack.c.h.b16 %v597
    %v964 = vunpack.c.l.b16 %v598
    %v965 = vunpack.c.h.b16 %v598
    %v966 = vunpack.c.l.b16 %v599
    %v967 = vunpack.c.h.b16 %v599
    %v968 = vunpack.c.l.b16 %v600
    %v969 = vunpack.c.h.b16 %v600
    %v970 = vunpack.c.l.b16 %v601
    %v971 = vunpack.c.h.b16 %v601
    %v972 = vunpack.c.l.b16 %v602
    %v973 = vunpack.c.h.b16 %v602
    %v974 = vunpack.c.l.b16 %v603
    %v975 = vunpack.c.h.b16 %v603
    %v976 = vunpack.c.l.b16 %v604
    %v977 = vunpack.c.h.b16 %v604
    %v978 = vunpack.c.l.b16 %v605
    %v979 = vunpack.c.h.b16 %v605
    %v980 = vunpack.c.l.b16 %v606
    %v981 = vunpack.c.h.b16 %v606
    %v982 = vunpack.c.l.b16 %v607
    %v983 = vunpack.c.h.b16 %v607
    %v984 = vunpack.c.l.b16 %v608
    %v985 = vunpack.c.h.b16 %v608
    %v986 = vunpack.c.l.b16 %v609
    %v987 = vunpack.c.h.b16 %v609
    %v988 = vunpack.c.l.b16 %v610
    %v989 = vunpack.c.h.b16 %v610
    %v990 = vunpack.c.l.b16 %v611
    %v991 = vunpack.c.h.b16 %v611
    %v992 = vunpack.c.l.b16 %v612
    %v993 = vunpack.c.h.b16 %v612
    %v994 = vunpack.c.l.b16 %v613
    %v995 = vunpack.c.h.b16 %v613
    %v996 = vunpack.c.l.b16 %v614
    %v997 = vunpack.c.h.b16 %v614
    %v998 = vunpack.c.l.b16 %v615
    %v999 = vunpack.c.h.b16 %v615
    %v1000 = vunpack.c.l.b16 %v616
    %v1001 = vunpack.c.h.b16 %v616
    %v1002 = vunpack.c.l.b16 %v617
    %v1003 = vunpack.c.h.b16 %v617
    %v1004 = vunpack.c.l.b16 %v618
    %v1005 = vunpack.c.h.b16 %v618
    %v1006 = vunpack.c.l.b16 %v619
    %v1007 = vunpack.c.h.b16 %v619
    %v1008 = vunpack.c.l.b16 %v620
    %v1009 = vunpack.c.h.b16 %v620
    %v1010 = vunpack.c.l.b16 %v621
    %v1011 = vunpack.c.h.b16 %v621
    %v1012 = vunpack.c.l.b16 %v622
    %v1013 = vunpack.c.h.b16 %v622
    %v1014 = vunpack.c.l.b16 %v623
    %v1015 = vunpack.c.h.b16 %v623
    %v1016 = vunpack.c.l.b16 %v624
    %v1017 = vunpack.c.h.b16 %v624
    %v1018 = vunpack.c.l.b16 %v625
    %v1019 = vunpack.c.h.b16 %v625
    %v1020 = vunpack.c.l.b16 %v626
    %v1021 = vunpack.c.h.b16 %v626
    %v1022 = vunpack.c.l.b16 %v627
    %v1023 = vunpack.c.h.b16 %v627
    %v1024 = vunpack.c.l.b16 %v628
    %v1025 = vunpack.c.h.b16 %v628
    %v1026 = vunpack.c.l.b16 %v629
    %v1027 = vunpack.c.h.b16 %v629
    %v1028 = vunpack.c.l.b16 %v630
    %v1029 = vunpack.c.h.b16 %v630
    %v1030 = vunpack.c.l.b16 %v631
    %v1031 = vunpack.c.h.b16 %v631
    %v1032 = vunpack.c.l.b16 %v632
    %v1033 = vunpack.c.h.b16 %v632
    %v1034 = vunpack.c.l.b16 %v633
    %v1035 = vunpack.c.h.b16 %v633
    %v1036 = vunpack.c.l.b16 %v634
    %v1037 = vunpack.c.h.b16 %v634
    %v1038 = vunpack.c.l.b16 %v635
    %v1039 = vunpack.c.h.b16 %v635
    %v1040 = vunpack.c.l.b16 %v636
    %v1041 = vunpack.c.h.b16 %v636
    %v1042 = vunpack.c.l.b16 %v637
    %v1043 = vunpack.c.h.b16 %v637
    %v1044 = vpack.c.b16 %v792, %v788
    %v1045 = vpack.c.b16 %v793, %v789
    %v1046 = vpack.c.b16 %v794, %v790
    %v1047 = vpack.c.b16 %v795, %v791
    %v1048 = vpack.c.b16 %v800, %v796
    %v1049 = vpack.c.b16 %v801, %v797
    %v1050 = vpack.c.b16 %v802, %v798
    %v1051 = vpack.c.b16 %v803, %v799
    %v1052 = vpack.c.b16 %v808, %v804
    %v1053 = vpack.c.b16 %v809, %v805
    %v1054 = vpack.c.b16 %v810, %v806
    %v1055 = vpack.c.b16 %v811, %v807
    %v1056 = vpack.c.b16 %v816, %v812
    %v1057 = vpack.c.b16 %v817, %v813
    %v1058 = vpack.c.b16 %v818, %v814
    %v1059 = vpack.c.b16 %v819, %v815
    %v1060 = vpack.c.b16 %v824, %v820
    %v1061 = vpack.c.b16 %v825, %v821
    %v1062 = vpack.c.b16 %v826, %v822
    %v1063 = vpack.c.b16 %v827, %v823
    %v1064 = vpack.c.b16 %v832, %v828
    %v1065 = vpack.c.b16 %v833, %v829
    %v1066 = vpack.c.b16 %v834, %v830
    %v1067 = vpack.c.b16 %v835, %v831
    %v1068 = vpack.c.b16 %v840, %v836
    %v1069 = vpack.c.b16 %v841, %v837
    %v1070 = vpack.c.b16 %v842, %v838
    %v1071 = vpack.c.b16 %v843, %v839
    %v1072 = vpack.c.b16 %v848, %v844
    %v1073 = vpack.c.b16 %v849, %v845
    %v1074 = vpack.c.b16 %v850, %v846
    %v1075 = vpack.c.b16 %v851, %v847
    %v1076 = vpack.c.b16 %v856, %v852
    %v1077 = vpack.c.b16 %v857, %v853
    %v1078 = vpack.c.b16 %v858, %v854
    %v1079 = vpack.c.b16 %v859, %v855
    %v1080 = vpack.c.b16 %v864, %v860
    %v1081 = vpack.c.b16 %v865, %v861
    %v1082 = vpack.c.b16 %v866, %v862
    %v1083 = vpack.c.b16 %v867, %v863
    %v1084 = vpack.c.b16 %v872, %v868
    %v1085 = vpack.c.b16 %v873, %v869
    %v1086 = vpack.c.b16 %v874, %v870
    %v1087 = vpack.c.b16 %v875, %v871
    %v1088 = vpack.c.b16 %v880, %v876
    %v1089 = vpack.c.b16 %v881, %v877
    %v1090 = vpack.c.b16 %v882, %v878
    %v1091 = vpack.c.b16 %v883, %v879
    %v1092 = vpack.c.b16 %v888, %v884
    %v1093 = vpack.c.b16 %v889, %v885
    %v1094 = vpack.c.b16 %v890, %v886
    %v1095 = vpack.c.b16 %v891, %v887
    %v1096 = vpack.c.b16 %v896, %v892
    %v1097 = vpack.c.b16 %v897, %v893
    %v1098 = vpack.c.b16 %v898, %v894
    %v1099 = vpack.c.b16 %v899, %v895
    %v1100 = vpack.c.b16 %v904, %v900
    %v1101 = vpack.c.b16 %v905, %v901
    %v1102 = vpack.c.b16 %v906, %v902
    %v1103 = vpack.c.b16 %v907, %v903
    %v1104 = vpack.c.b16 %v912, %v908
    %v1105 = vpack.c.b16 %v913, %v909
    %v1106 = vpack.c.b16 %v914, %v910
    %v1107 = vpack.c.b16 %v915, %v911
    %v1108 = vpack.c.b16 %v920, %v916
    %v1109 = vpack.c.b16 %v921, %v917
    %v1110 = vpack.c.b16 %v922, %v918
    %v1111 = vpack.c.b16 %v923, %v919
    %v1112 = vpack.c.b16 %v928, %v924
    %v1113 = vpack.c.b16 %v929, %v925
    %v1114 = vpack.c.b16 %v930, %v926
    %v1115 = vpack.c.b16 %v931, %v927
    %v1116 = vpack.c.b16 %v936, %v932
    %v1117 = vpack.c.b16 %v937, %v933
    %v1118 = vpack.c.b16 %v938, %v934
    %v1119 = vpack.c.b16 %v939, %v935
    %v1120 = vpack.c.b16 %v944, %v940
    %v1121 = vpack.c.b16 %v945, %v941
    %v1122 = vpack.c.b16 %v946, %v942
    %v1123 = vpack.c.b16 %v947, %v943
    %v1124 = vpack.c.b16 %v952, %v948
    %v1125 = vpack.c.b16 %v953, %v949
    %v1126 = vpack.c.b16 %v954, %v950
    %v1127 = vpack.c.b16 %v955, %v951
    %v1128 = vpack.c.b16 %v960, %v956
    %v1129 = vpack.c.b16 %v961, %v957
    %v1130 = vpack.c.b16 %v962, %v958
    %v1131 = vpack.c.b16 %v963, %v959
    %v1132 = vpack.c.b16 %v968, %v964
    %v1133 = vpack.c.b16 %v969, %v965
    %v1134 = vpack.c.b16 %v970, %v966
    %v1135 = vpack.c.b16 %v971, %v967
    %v1136 = vpack.c.b16 %v976, %v972
    %v1137 = vpack.c.b16 %v977, %v973
    %v1138 = vpack.c.b16 %v978, %v974
    %v1139 = vpack.c.b16 %v979, %v975
    %v1140 = vpack.c.b16 %v984, %v980
    %v1141 = vpack.c.b16 %v985, %v981
    %v1142 = vpack.c.b16 %v986, %v982
    %v1143 = vpack.c.b16 %v987, %v983
    %v1144 = vpack.c.b16 %v992, %v988
    %v1145 = vpack.c.b16 %v993, %v989
    %v1146 = vpack.c.b16 %v994, %v990
    %v1147 = vpack.c.b16 %v995, %v991
    %v1148 = vpack.c.b16 %v1000, %v996
    %v1149 = vpack.c.b16 %v1001, %v997
    %v1150 = vpack.c.b16 %v1002, %v998
    %v1151 = vpack.c.b16 %v1003, %v999
    %v1152 = vpack.c.b16 %v1008, %v1004
    %v1153 = vpack.c.b16 %v1009, %v1005
    %v1154 = vpack.c.b16 %v1010, %v1006
    %v1155 = vpack.c.b16 %v1011, %v1007
    %v1156 = vpack.c.b16 %v1016, %v1012
    %v1157 = vpack.c.b16 %v1017, %v1013
    %v1158 = vpack.c.b16 %v1018, %v1014
    %v1159 = vpack.c.b16 %v1019, %v1015
    %v1160 = vpack.c.b16 %v1024, %v1020
    %v1161 = vpack.c.b16 %v1025, %v1021
    %v1162 = vpack.c.b16 %v1026, %v1022
    %v1163 = vpack.c.b16 %v1027, %v1023
    %v1164 = vpack.c.b16 %v1032, %v1028
    %v1165 = vpack.c.b16 %v1033, %v1029
    %v1166 = vpack.c.b16 %v1034, %v1030
    %v1167 = vpack.c.b16 %v1035, %v1031
    %v1168 = vpack.c.b16 %v1040, %v1036
    %v1169 = vpack.c.b16 %v1041, %v1037
    %v1170 = vpack.c.b16 %v1042, %v1038
    %v1171 = vpack.c.b16 %v1043, %v1039
    %1300 = vmatprep.subr.bf16.mxu0 %v1073
    %1301 = vmatpush1.bf16.msra.mxu0 %v1072
    %1302 = vmatprep.subr.bf16.mxu0 %v1069
    %1303 = vmatpush1.bf16.msra.mxu0 %v1068
    %1304 = vmatprep.subr.bf16.mxu0 %v1065
    %1305 = vmatpush1.bf16.msra.mxu0 %v1064
    %1306 = vmatprep.subr.bf16.mxu0 %v1061
    %1307 = vmatpush1.bf16.msra.mxu0 %v1060
    %1308 = vmatprep.subr.bf16.mxu0 %v1057
    %1309 = vmatpush1.bf16.msra.mxu0 %v1056
    %1310 = vmatprep.subr.bf16.mxu0 %v1053
    %1311 = vmatpush1.bf16.msra.mxu0 %v1052
    %1312 = vmatprep.subr.bf16.mxu0 %v1049
    %1313 = vmatpush1.bf16.msra.mxu0 %v1048
    %1314 = vmatprep.subr.bf16.mxu0 %v1045
    %1315 = vmatpush1.bf16.msra.mxu0 %v1044
    %1316 = vmatprep.subr.bf16.mxu0 %v1105
    %1317 = vmatpush2.bf16.msra.mxu0 %v1104
    %1318 = vmatprep.subr.bf16.mxu0 %v1101
    %1319 = vmatpush2.bf16.msra.mxu0 %v1100
    %1320 = vmatprep.subr.bf16.mxu0 %v1097
    %1321 = vmatpush2.bf16.msra.mxu0 %v1096
    %1322 = vmatprep.subr.bf16.mxu0 %v1093
    %1323 = vmatpush2.bf16.msra.mxu0 %v1092
    %1324 = vmatprep.subr.bf16.mxu0 %v1089
    %1325 = vmatpush2.bf16.msra.mxu0 %v1088
    %1326 = vmatprep.subr.bf16.mxu0 %v1085
    %1327 = vmatpush2.bf16.msra.mxu0 %v1084
    %1328 = vmatprep.subr.bf16.mxu0 %v1081
    %1329 = vmatpush2.bf16.msra.mxu0 %v1080
    %1330 = vmatprep.subr.bf16.mxu0 %v1077
    %1331 = vmatpush2.bf16.msra.mxu0 %v1076
    %1332 = vmatprep.mubr.bf16.mxu0 %v507
    %1333 = vmatmul.mubr.bf16.gmra.mxu0 %v506
    %v1334 = vpop.f32.mrf.mxu0
    %v1335 = vadd.f32 %v643, %v1334
    %v1336 = vpop.f32.mrf.mxu0
    %v1337 = vadd.f32 %v647, %v1336
    %v1338 = vpop.f32.mrf.mxu0
    %v1339 = vpop.f32.mrf.mxu0
    %1340 = vdwg.mxu0
    %1341 = vmatprep.subr.bf16.mxu0 %v1137
    %1342 = vmatpush1.bf16.msra.mxu0 %v1136
    %1343 = vmatprep.subr.bf16.mxu0 %v1133
    %1344 = vmatpush1.bf16.msra.mxu0 %v1132
    %1345 = vmatprep.subr.bf16.mxu0 %v1129
    %1346 = vmatpush1.bf16.msra.mxu0 %v1128
    %1347 = vmatprep.subr.bf16.mxu0 %v1125
    %1348 = vmatpush1.bf16.msra.mxu0 %v1124
    %1349 = vmatprep.subr.bf16.mxu0 %v1121
    %1350 = vmatpush1.bf16.msra.mxu0 %v1120
    %1351 = vmatprep.subr.bf16.mxu0 %v1117
    %1352 = vmatpush1.bf16.msra.mxu0 %v1116
    %1353 = vmatprep.subr.bf16.mxu0 %v1113
    %1354 = vmatpush1.bf16.msra.mxu0 %v1112
    %1355 = vmatprep.subr.bf16.mxu0 %v1109
    %1356 = vmatpush1.bf16.msra.mxu0 %v1108
    %1357 = vmatprep.subr.bf16.mxu0 %v1169
    %1358 = vmatpush2.bf16.msra.mxu0 %v1168
    %1359 = vmatprep.subr.bf16.mxu0 %v1165
    %1360 = vmatpush2.bf16.msra.mxu0 %v1164
    %1361 = vmatprep.subr.bf16.mxu0 %v1161
    %1362 = vmatpush2.bf16.msra.mxu0 %v1160
    %1363 = vmatprep.subr.bf16.mxu0 %v1157
    %1364 = vmatpush2.bf16.msra.mxu0 %v1156
    %1365 = vmatprep.subr.bf16.mxu0 %v1153
    %1366 = vmatpush2.bf16.msra.mxu0 %v1152
    %1367 = vmatprep.subr.bf16.mxu0 %v1149
    %1368 = vmatpush2.bf16.msra.mxu0 %v1148
    %1369 = vmatprep.subr.bf16.mxu0 %v1145
    %1370 = vmatpush2.bf16.msra.mxu0 %v1144
    %1371 = vmatprep.subr.bf16.mxu0 %v1141
    %1372 = vmatpush2.bf16.msra.mxu0 %v1140
    %1373 = vmatprep.mubr.bf16.mxu0 %v509
    %1374 = vmatmul.mubr.bf16.gmra.mxu0 %v508
    %v1375 = vpop.f32.mrf.mxu0
    %v1376 = vadd.f32 %v1335, %v1375
    %v1377 = vpop.f32.mrf.mxu0
    %v1378 = vadd.f32 %v1337, %v1377
    %v1379 = vpop.f32.mrf.mxu0
    %v1380 = vpop.f32.mrf.mxu0
    %1381 = vdwg.mxu0
    %1382 = vmatprep.subr.bf16.mxu0 %v1075
    %1383 = vmatpush1.bf16.msra.mxu0 %v1074
    %1384 = vmatprep.subr.bf16.mxu0 %v1071
    %1385 = vmatpush1.bf16.msra.mxu0 %v1070
    %1386 = vmatprep.subr.bf16.mxu0 %v1067
    %1387 = vmatpush1.bf16.msra.mxu0 %v1066
    %1388 = vmatprep.subr.bf16.mxu0 %v1063
    %1389 = vmatpush1.bf16.msra.mxu0 %v1062
    %1390 = vmatprep.subr.bf16.mxu0 %v1059
    %1391 = vmatpush1.bf16.msra.mxu0 %v1058
    %1392 = vmatprep.subr.bf16.mxu0 %v1055
    %1393 = vmatpush1.bf16.msra.mxu0 %v1054
    %1394 = vmatprep.subr.bf16.mxu0 %v1051
    %1395 = vmatpush1.bf16.msra.mxu0 %v1050
    %1396 = vmatprep.subr.bf16.mxu0 %v1047
    %1397 = vmatpush1.bf16.msra.mxu0 %v1046
    %1398 = vmatprep.subr.bf16.mxu0 %v1107
    %1399 = vmatpush2.bf16.msra.mxu0 %v1106
    %1400 = vmatprep.subr.bf16.mxu0 %v1103
    %1401 = vmatpush2.bf16.msra.mxu0 %v1102
    %1402 = vmatprep.subr.bf16.mxu0 %v1099
    %1403 = vmatpush2.bf16.msra.mxu0 %v1098
    %1404 = vmatprep.subr.bf16.mxu0 %v1095
    %1405 = vmatpush2.bf16.msra.mxu0 %v1094
    %1406 = vmatprep.subr.bf16.mxu0 %v1091
    %1407 = vmatpush2.bf16.msra.mxu0 %v1090
    %1408 = vmatprep.subr.bf16.mxu0 %v1087
    %1409 = vmatpush2.bf16.msra.mxu0 %v1086
    %1410 = vmatprep.subr.bf16.mxu0 %v1083
    %1411 = vmatpush2.bf16.msra.mxu0 %v1082
    %1412 = vmatprep.subr.bf16.mxu0 %v1079
    %1413 = vmatpush2.bf16.msra.mxu0 %v1078
    %1414 = vmatprep.mubr.bf16.mxu0 %v507
    %1415 = vmatmul.mubr.bf16.gmra.mxu0 %v506
    %v1416 = vpop.f32.mrf.mxu0
    %v1417 = vadd.f32 %v651, %v1416
    %v1418 = vpop.f32.mrf.mxu0
    %v1419 = vadd.f32 %v655, %v1418
    %v1420 = vpop.f32.mrf.mxu0
    %v1421 = vpop.f32.mrf.mxu0
    %1422 = vdwg.mxu0
    %1423 = vmatprep.subr.bf16.mxu0 %v1139
    %1424 = vmatpush1.bf16.msra.mxu0 %v1138
    %1425 = vmatprep.subr.bf16.mxu0 %v1135
    %1426 = vmatpush1.bf16.msra.mxu0 %v1134
    %1427 = vmatprep.subr.bf16.mxu0 %v1131
    %1428 = vmatpush1.bf16.msra.mxu0 %v1130
    %1429 = vmatprep.subr.bf16.mxu0 %v1127
    %1430 = vmatpush1.bf16.msra.mxu0 %v1126
    %1431 = vmatprep.subr.bf16.mxu0 %v1123
    %1432 = vmatpush1.bf16.msra.mxu0 %v1122
    %1433 = vmatprep.subr.bf16.mxu0 %v1119
    %1434 = vmatpush1.bf16.msra.mxu0 %v1118
    %1435 = vmatprep.subr.bf16.mxu0 %v1115
    %1436 = vmatpush1.bf16.msra.mxu0 %v1114
    %1437 = vmatprep.subr.bf16.mxu0 %v1111
    %1438 = vmatpush1.bf16.msra.mxu0 %v1110
    %1439 = vmatprep.subr.bf16.mxu0 %v1171
    %1440 = vmatpush2.bf16.msra.mxu0 %v1170
    %1441 = vmatprep.subr.bf16.mxu0 %v1167
    %1442 = vmatpush2.bf16.msra.mxu0 %v1166
    %1443 = vmatprep.subr.bf16.mxu0 %v1163
    %1444 = vmatpush2.bf16.msra.mxu0 %v1162
    %1445 = vmatprep.subr.bf16.mxu0 %v1159
    %1446 = vmatpush2.bf16.msra.mxu0 %v1158
    %1447 = vmatprep.subr.bf16.mxu0 %v1155
    %1448 = vmatpush2.bf16.msra.mxu0 %v1154
    %1449 = vmatprep.subr.bf16.mxu0 %v1151
    %1450 = vmatpush2.bf16.msra.mxu0 %v1150
    %1451 = vmatprep.subr.bf16.mxu0 %v1147
    %1452 = vmatpush2.bf16.msra.mxu0 %v1146
    %1453 = vmatprep.subr.bf16.mxu0 %v1143
    %1454 = vmatpush2.bf16.msra.mxu0 %v1142
    %1455 = vmatprep.mubr.bf16.mxu0 %v509
    %1456 = vmatmul.mubr.bf16.gmra.mxu0 %v508
    %v1457 = vpop.f32.mrf.mxu0
    %v1458 = vadd.f32 %v1417, %v1457
    %v1459 = vpop.f32.mrf.mxu0
    %v1460 = vadd.f32 %v1419, %v1459
    %v1461 = vpop.f32.mrf.mxu0
    %v1462 = vpop.f32.mrf.mxu0
    %1463 = vdwg.mxu0
    %v1464 = vmax.f32 %v1376, 0.0
    %v1465 = vmax.f32 %v1378, 0.0
    %v1466 = vmax.f32 %v1458, 0.0
    %v1467 = vmax.f32 %v1460, 0.0
    %v1468 = vpack.c.bf16 %v1464, %v1464
    %v1469 = vpack.c.bf16 %v1465, %v1465
    %v1470 = vpack.c.bf16 %v1466, %v1466
    %v1471 = vpack.c.bf16 %v1467, %v1467
    %v1472 = vld [vmem:[#allocation10] sm:$0xff]
    %v1473 = vld [vmem:[#allocation10 + $0x8] sm:$0xff]
    %v1474 = vld [vmem:[#allocation10 + $0x10] sm:$0xf]
    %v1475 = vld [vmem:[#allocation10 + $0x14] sm:$0xff]
    %v1476 = vld [vmem:[#allocation10 + $0x1c] sm:$0xff]
    %v1477 = vld [vmem:[#allocation10 + $0x24] sm:$0xf]
    %v1478 = vld [vmem:[#allocation10 + $0x28] sm:$0xff]
    %v1479 = vld [vmem:[#allocation10 + $0x30] sm:$0xff]
    %v1480 = vld [vmem:[#allocation10 + $0x38] sm:$0xf]
    %v1481 = vld [vmem:[#allocation10 + $0x3c] sm:$0xff]
    %v1482 = vld [vmem:[#allocation10 + $0x44] sm:$0xff]
    %v1483 = vld [vmem:[#allocation10 + $0x4c] sm:$0xf]
    %v1484 = vld [vmem:[#allocation10 + $0x50] sm:$0xff]
    %v1485 = vld [vmem:[#allocation10 + $0x58] sm:$0xff]
    %v1486 = vld [vmem:[#allocation10 + $0x60] sm:$0xf]
    %v1487 = vld [vmem:[#allocation10 + $0x64] sm:$0xff]
    %v1488 = vld [vmem:[#allocation10 + $0x6c] sm:$0xff]
    %v1489 = vld [vmem:[#allocation10 + $0x74] sm:$0xf]
    %v1490 = vld [vmem:[#allocation10 + $0x78] sm:$0xff]
    %v1491 = vld [vmem:[#allocation10 + $0x80] sm:$0xff]
    %v1492 = vld [vmem:[#allocation10 + $0x88] sm:$0xf]
    %v1493 = vld [vmem:[#allocation10 + $0x8c] sm:$0xff]
    %v1494 = vld [vmem:[#allocation10 + $0x94] sm:$0xff]
    %v1495 = vld [vmem:[#allocation10 + $0x9c] sm:$0xf]
    %v1496 = vld [vmem:[#allocation10 + $0xa0] sm:$0xff]
    %v1497 = vld [vmem:[#allocation10 + $0xa8] sm:$0xff]
    %v1498 = vld [vmem:[#allocation10 + $0xb0] sm:$0xf]
    %v1499 = vld [vmem:[#allocation10 + $0xb4] sm:$0xff]
    %v1500 = vld [vmem:[#allocation10 + $0xbc] sm:$0xff]
    %v1501 = vld [vmem:[#allocation10 + $0xc4] sm:$0xf]
    %v1502 = vld [vmem:[#allocation10 + $0xc8] sm:$0xff]
    %v1503 = vld [vmem:[#allocation10 + $0xd0] sm:$0xff]
    %v1504 = vld [vmem:[#allocation10 + $0xd8] sm:$0xf]
    %v1505 = vld [vmem:[#allocation10 + $0xdc] sm:$0xff]
    %v1506 = vld [vmem:[#allocation10 + $0xe4] sm:$0xff]
    %v1507 = vld [vmem:[#allocation10 + $0xec] sm:$0xf]
    %v1508 = vld [vmem:[#allocation10 + $0xf0] sm:$0xff]
    %v1509 = vld [vmem:[#allocation10 + $0xf8] sm:$0xff]
    %v1510 = vld [vmem:[#allocation10 + $0x100] sm:$0xf]
    %v1511 = vld [vmem:[#allocation10 + $0x104] sm:$0xff]
    %v1512 = vld [vmem:[#allocation10 + $0x10c] sm:$0xff]
    %v1513 = vld [vmem:[#allocation10 + $0x114] sm:$0xf]
    %v1514 = vld [vmem:[#allocation10 + $0x118] sm:$0xff]
    %v1515 = vld [vmem:[#allocation10 + $0x120] sm:$0xff]
    %v1516 = vld [vmem:[#allocation10 + $0x128] sm:$0xf]
    %v1517 = vld [vmem:[#allocation10 + $0x12c] sm:$0xff]
    %v1518 = vld [vmem:[#allocation10 + $0x134] sm:$0xff]
    %v1519 = vld [vmem:[#allocation10 + $0x13c] sm:$0xf]
    %v1520 = vld [vmem:[#allocation10 + $0x140] sm:$0xff]
    %v1521 = vld [vmem:[#allocation10 + $0x148] sm:$0xff]
    %v1522 = vld [vmem:[#allocation10 + $0x150] sm:$0xf]
    %v1523 = vld [vmem:[#allocation10 + $0x154] sm:$0xff]
    %v1524 = vld [vmem:[#allocation10 + $0x15c] sm:$0xff]
    %v1525 = vld [vmem:[#allocation10 + $0x164] sm:$0xf]
    %v1526 = vld [vmem:[#allocation10 + $0x168] sm:$0xff]
    %v1527 = vld [vmem:[#allocation10 + $0x170] sm:$0xff]
    %v1528 = vld [vmem:[#allocation10 + $0x178] sm:$0xf]
    %v1529 = vld [vmem:[#allocation10 + $0x17c] sm:$0xff]
    %v1530 = vld [vmem:[#allocation10 + $0x184] sm:$0xff]
    %v1531 = vld [vmem:[#allocation10 + $0x18c] sm:$0xf]
    %v1532 = vld [vmem:[#allocation10 + $0x190] sm:$0xff]
    %v1533 = vld [vmem:[#allocation10 + $0x198] sm:$0xff]
    %v1534 = vld [vmem:[#allocation10 + $0x1a0] sm:$0xf]
    %v1535 = vld [vmem:[#allocation10 + $0x1a4] sm:$0xff]
    %v1536 = vld [vmem:[#allocation10 + $0x1ac] sm:$0xff]
    %v1537 = vld [vmem:[#allocation10 + $0x1b4] sm:$0xf]
    %v1538 = vld [vmem:[#allocation10 + $0x1b8] sm:$0xff]
    %v1539 = vld [vmem:[#allocation10 + $0x1c0] sm:$0xff]
    %v1540 = vld [vmem:[#allocation10 + $0x1c8] sm:$0xf]
    %v1541 = vld [vmem:[#allocation10 + $0x1cc] sm:$0xff]
    %v1542 = vld [vmem:[#allocation10 + $0x1d4] sm:$0xff]
    %v1543 = vld [vmem:[#allocation10 + $0x1dc] sm:$0xf]
    %v1544 = vld [vmem:[#allocation10 + $0x1e0] sm:$0xff]
    %v1545 = vld [vmem:[#allocation10 + $0x1e8] sm:$0xff]
    %v1546 = vld [vmem:[#allocation10 + $0x1f0] sm:$0xf]
    %v1547 = vld [vmem:[#allocation10 + $0x1f4] sm:$0xff]
    %v1548 = vld [vmem:[#allocation10 + $0x1fc] sm:$0xff]
    %v1549 = vld [vmem:[#allocation10 + $0x204] sm:$0xf]
    %v1550 = vld [vmem:[#allocation10 + $0x208] sm:$0xff]
    %v1551 = vld [vmem:[#allocation10 + $0x210] sm:$0xff]
    %v1552 = vld [vmem:[#allocation10 + $0x218] sm:$0xf]
    %v1553 = vld [vmem:[#allocation10 + $0x21c] sm:$0xff]
    %v1554 = vld [vmem:[#allocation10 + $0x224] sm:$0xff]
    %v1555 = vld [vmem:[#allocation10 + $0x22c] sm:$0xf]
    %v1556 = vld [vmem:[#allocation10 + $0x230] sm:$0xff]
    %v1557 = vld [vmem:[#allocation10 + $0x238] sm:$0xff]
    %v1558 = vld [vmem:[#allocation10 + $0x240] sm:$0xf]
    %v1559 = vld [vmem:[#allocation10 + $0x244] sm:$0xff]
    %v1560 = vld [vmem:[#allocation10 + $0x24c] sm:$0xff]
    %v1561 = vld [vmem:[#allocation10 + $0x254] sm:$0xf]
    %v1562 = vld [vmem:[#allocation10 + $0x258] sm:$0xff]
    %v1563 = vld [vmem:[#allocation10 + $0x260] sm:$0xff]
    %v1564 = vld [vmem:[#allocation10 + $0x268] sm:$0xf]
    %v1565 = vld [vmem:[#allocation10 + $0x26c] sm:$0xff]
    %v1566 = vld [vmem:[#allocation10 + $0x274] sm:$0xff]
    %v1567 = vld [vmem:[#allocation10 + $0x27c] sm:$0xf]
    %v1568 = vld [vmem:[#allocation10 + $0x280] sm:$0xff]
    %v1569 = vld [vmem:[#allocation10 + $0x288] sm:$0xff]
    %v1570 = vld [vmem:[#allocation10 + $0x290] sm:$0xf]
    %v1571 = vld [vmem:[#allocation10 + $0x294] sm:$0xff]
    %v1572 = vld [vmem:[#allocation10 + $0x29c] sm:$0xff]
    %v1573 = vld [vmem:[#allocation10 + $0x2a4] sm:$0xf]
    %v1574 = vld [vmem:[#allocation10 + $0x2a8] sm:$0xff]
    %v1575 = vld [vmem:[#allocation10 + $0x2b0] sm:$0xff]
    %v1576 = vld [vmem:[#allocation10 + $0x2b8] sm:$0xf]
    %v1577 = vld [vmem:[#allocation10 + $0x2bc] sm:$0xff]
    %v1578 = vld [vmem:[#allocation10 + $0x2c4] sm:$0xff]
    %v1579 = vld [vmem:[#allocation10 + $0x2cc] sm:$0xf]
    %v1580 = vld [vmem:[#allocation10 + $0x2d0] sm:$0xff]
    %v1581 = vld [vmem:[#allocation10 + $0x2d8] sm:$0xff]
    %v1582 = vld [vmem:[#allocation10 + $0x2e0] sm:$0xf]
    %v1583 = vld [vmem:[#allocation10 + $0x2e4] sm:$0xff]
    %v1584 = vld [vmem:[#allocation10 + $0x2ec] sm:$0xff]
    %v1585 = vld [vmem:[#allocation10 + $0x2f4] sm:$0xf]
    %v1586 = vld [vmem:[#allocation10 + $0x2f8] sm:$0xff]
    %v1587 = vld [vmem:[#allocation10 + $0x300] sm:$0xff]
    %v1588 = vld [vmem:[#allocation10 + $0x308] sm:$0xf]
    %v1589 = vld [vmem:[#allocation10 + $0x30c] sm:$0xff]
    %v1590 = vld [vmem:[#allocation10 + $0x314] sm:$0xff]
    %v1591 = vld [vmem:[#allocation10 + $0x31c] sm:$0xf]
    %v1592 = vld [vmem:[#allocation10 + $0x320] sm:$0xff]
    %v1593 = vld [vmem:[#allocation10 + $0x328] sm:$0xff]
    %v1594 = vld [vmem:[#allocation10 + $0x330] sm:$0xf]
    %v1595 = vld [vmem:[#allocation10 + $0x334] sm:$0xff]
    %v1596 = vld [vmem:[#allocation10 + $0x33c] sm:$0xff]
    %v1597 = vld [vmem:[#allocation10 + $0x344] sm:$0xf]
    %v1598 = vld [vmem:[#allocation10 + $0x348] sm:$0xff]
    %v1599 = vld [vmem:[#allocation10 + $0x350] sm:$0xff]
    %v1600 = vld [vmem:[#allocation10 + $0x358] sm:$0xf]
    %v1601 = vld [vmem:[#allocation10 + $0x35c] sm:$0xff]
    %v1602 = vld [vmem:[#allocation10 + $0x364] sm:$0xff]
    %v1603 = vld [vmem:[#allocation10 + $0x36c] sm:$0xf]
    %v1604 = vld [vmem:[#allocation10 + $0x370] sm:$0xff]
    %v1605 = vld [vmem:[#allocation10 + $0x378] sm:$0xff]
    %v1606 = vld [vmem:[#allocation10 + $0x380] sm:$0xf]
    %v1607 = vld [vmem:[#allocation10 + $0x384] sm:$0xff]
    %v1608 = vld [vmem:[#allocation10 + $0x38c] sm:$0xff]
    %v1609 = vld [vmem:[#allocation10 + $0x394] sm:$0xf]
    %v1610 = vld [vmem:[#allocation10 + $0x398] sm:$0xff]
    %v1611 = vld [vmem:[#allocation10 + $0x3a0] sm:$0xff]
    %v1612 = vld [vmem:[#allocation10 + $0x3a8] sm:$0xf]
    %v1613 = vld [vmem:[#allocation10 + $0x3ac] sm:$0xff]
    %v1614 = vld [vmem:[#allocation10 + $0x3b4] sm:$0xff]
    %v1615 = vld [vmem:[#allocation10 + $0x3bc] sm:$0xf]
    %v1616 = vld [vmem:[#allocation10 + $0x3c0] sm:$0xff]
    %v1617 = vld [vmem:[#allocation10 + $0x3c8] sm:$0xff]
    %v1618 = vld [vmem:[#allocation10 + $0x3d0] sm:$0xf]
    %v1619 = vld [vmem:[#allocation10 + $0x3d4] sm:$0xff]
    %v1620 = vld [vmem:[#allocation10 + $0x3dc] sm:$0xff]
    %v1621 = vld [vmem:[#allocation10 + $0x3e4] sm:$0xf]
    %v1622 = vld [vmem:[#allocation10 + $0x3e8] sm:$0xff]
    %v1623 = vld [vmem:[#allocation10 + $0x3f0] sm:$0xff]
    %v1624 = vld [vmem:[#allocation10 + $0x3f8] sm:$0xf]
    %v1625 = vld [vmem:[#allocation10 + $0x3fc] sm:$0xff]
    %v1626 = vld [vmem:[#allocation10 + $0x404] sm:$0xff]
    %v1627 = vld [vmem:[#allocation10 + $0x40c] sm:$0xf]
    %v1628 = vld [vmem:[#allocation10 + $0x410] sm:$0xff]
    %v1629 = vld [vmem:[#allocation10 + $0x418] sm:$0xff]
    %v1630 = vld [vmem:[#allocation10 + $0x420] sm:$0xf]
    %v1631 = vld [vmem:[#allocation10 + $0x424] sm:$0xff]
    %v1632 = vld [vmem:[#allocation10 + $0x42c] sm:$0xff]
    %v1633 = vld [vmem:[#allocation10 + $0x434] sm:$0xf]
    %v1634 = vld [vmem:[#allocation10 + $0x438] sm:$0xff]
    %v1635 = vld [vmem:[#allocation10 + $0x440] sm:$0xff]
    %v1636 = vld [vmem:[#allocation10 + $0x448] sm:$0xf]
    %v1637 = vld [vmem:[#allocation10 + $0x44c] sm:$0xff]
    %v1638 = vld [vmem:[#allocation10 + $0x454] sm:$0xff]
    %v1639 = vld [vmem:[#allocation10 + $0x45c] sm:$0xf]
    %v1640 = vld [vmem:[#allocation10 + $0x460] sm:$0xff]
    %v1641 = vld [vmem:[#allocation10 + $0x468] sm:$0xff]
    %v1642 = vld [vmem:[#allocation10 + $0x470] sm:$0xf]
    %v1643 = vld [vmem:[#allocation10 + $0x474] sm:$0xff]
    %v1644 = vld [vmem:[#allocation10 + $0x47c] sm:$0xff]
    %v1645 = vld [vmem:[#allocation10 + $0x484] sm:$0xf]
    %v1646 = vld [vmem:[#allocation10 + $0x488] sm:$0xff]
    %v1647 = vld [vmem:[#allocation10 + $0x490] sm:$0xff]
    %v1648 = vld [vmem:[#allocation10 + $0x498] sm:$0xf]
    %v1649 = vld [vmem:[#allocation10 + $0x49c] sm:$0xff]
    %v1650 = vld [vmem:[#allocation10 + $0x4a4] sm:$0xff]
    %v1651 = vld [vmem:[#allocation10 + $0x4ac] sm:$0xf]
    %v1652 = vld [vmem:[#allocation10 + $0x4b0] sm:$0xff]
    %v1653 = vld [vmem:[#allocation10 + $0x4b8] sm:$0xff]
    %v1654 = vld [vmem:[#allocation10 + $0x4c0] sm:$0xf]
    %v1655 = vld [vmem:[#allocation10 + $0x4c4] sm:$0xff]
    %v1656 = vld [vmem:[#allocation10 + $0x4cc] sm:$0xff]
    %v1657 = vld [vmem:[#allocation10 + $0x4d4] sm:$0xf]
    %v1658 = vld [vmem:[#allocation10 + $0x4d8] sm:$0xff]
    %v1659 = vld [vmem:[#allocation10 + $0x4e0] sm:$0xff]
    %v1660 = vld [vmem:[#allocation10 + $0x4e8] sm:$0xf]
    %v1661 = vld [vmem:[#allocation10 + $0x4ec] sm:$0xff]
    %v1662 = vld [vmem:[#allocation10 + $0x4f4] sm:$0xff]
    %v1663 = vld [vmem:[#allocation10 + $0x4fc] sm:$0xf]
    %v1664 = vld [vmem:[%s6] sm:$0x1f]
    %v1666 = vlaneseq
    %v1667 = vshrl.u32 %v1666, 7
    %v1668 = vsub.s32 0, %v1667
    %v1669 = vrot.slane %v1664, %v1668
    %v1670 = vlaneseq
    %v1671 = vshrl.u32 %v1670, 7
    %v1672 = vsub.s32 1, %v1671
    %v1673 = vrot.slane %v1664, %v1672
    %v1674 = vlaneseq
    %v1675 = vshrl.u32 %v1674, 7
    %v1676 = vsub.s32 2, %v1675
    %v1677 = vrot.slane %v1664, %v1676
    %v1678 = vlaneseq
    %v1679 = vshrl.u32 %v1678, 7
    %v1680 = vsub.s32 3, %v1679
    %v1681 = vrot.slane %v1664, %v1680
    %v1682 = vlaneseq
    %v1683 = vshrl.u32 %v1682, 7
    %v1684 = vsub.s32 4, %v1683
    %v1685 = vrot.slane %v1664, %v1684
    %v1883 = vunpack.c.l.b16 %v1472
    %v1884 = vunpack.c.h.b16 %v1472
    %v1885 = vunpack.c.l.b16 %v1473
    %v1886 = vunpack.c.h.b16 %v1473
    %v1887 = vunpack.c.l.b16 %v1474
    %v1888 = vunpack.c.l.b16 %v1475
    %v1889 = vunpack.c.h.b16 %v1475
    %v1890 = vunpack.c.l.b16 %v1476
    %v1891 = vunpack.c.h.b16 %v1476
    %v1892 = vunpack.c.l.b16 %v1477
    %v1893 = vunpack.c.l.b16 %v1478
    %v1894 = vunpack.c.h.b16 %v1478
    %v1895 = vunpack.c.l.b16 %v1479
    %v1896 = vunpack.c.h.b16 %v1479
    %v1897 = vunpack.c.l.b16 %v1480
    %v1898 = vunpack.c.l.b16 %v1481
    %v1899 = vunpack.c.h.b16 %v1481
    %v1900 = vunpack.c.l.b16 %v1482
    %v1901 = vunpack.c.h.b16 %v1482
    %v1902 = vunpack.c.l.b16 %v1483
    %v1903 = vunpack.c.l.b16 %v1484
    %v1904 = vunpack.c.h.b16 %v1484
    %v1905 = vunpack.c.l.b16 %v1485
    %v1906 = vunpack.c.h.b16 %v1485
    %v1907 = vunpack.c.l.b16 %v1486
    %v1908 = vunpack.c.l.b16 %v1487
    %v1909 = vunpack.c.h.b16 %v1487
    %v1910 = vunpack.c.l.b16 %v1488
    %v1911 = vunpack.c.h.b16 %v1488
    %v1912 = vunpack.c.l.b16 %v1489
    %v1913 = vunpack.c.l.b16 %v1490
    %v1914 = vunpack.c.h.b16 %v1490
    %v1915 = vunpack.c.l.b16 %v1491
    %v1916 = vunpack.c.h.b16 %v1491
    %v1917 = vunpack.c.l.b16 %v1492
    %v1918 = vunpack.c.l.b16 %v1493
    %v1919 = vunpack.c.h.b16 %v1493
    %v1920 = vunpack.c.l.b16 %v1494
    %v1921 = vunpack.c.h.b16 %v1494
    %v1922 = vunpack.c.l.b16 %v1495
    %v1923 = vunpack.c.l.b16 %v1496
    %v1924 = vunpack.c.h.b16 %v1496
    %v1925 = vunpack.c.l.b16 %v1497
    %v1926 = vunpack.c.h.b16 %v1497
    %v1927 = vunpack.c.l.b16 %v1498
    %v1928 = vunpack.c.l.b16 %v1499
    %v1929 = vunpack.c.h.b16 %v1499
    %v1930 = vunpack.c.l.b16 %v1500
    %v1931 = vunpack.c.h.b16 %v1500
    %v1932 = vunpack.c.l.b16 %v1501
    %v1933 = vunpack.c.l.b16 %v1502
    %v1934 = vunpack.c.h.b16 %v1502
    %v1935 = vunpack.c.l.b16 %v1503
    %v1936 = vunpack.c.h.b16 %v1503
    %v1937 = vunpack.c.l.b16 %v1504
    %v1938 = vunpack.c.l.b16 %v1505
    %v1939 = vunpack.c.h.b16 %v1505
    %v1940 = vunpack.c.l.b16 %v1506
    %v1941 = vunpack.c.h.b16 %v1506
    %v1942 = vunpack.c.l.b16 %v1507
    %v1943 = vunpack.c.l.b16 %v1508
    %v1944 = vunpack.c.h.b16 %v1508
    %v1945 = vunpack.c.l.b16 %v1509
    %v1946 = vunpack.c.h.b16 %v1509
    %v1947 = vunpack.c.l.b16 %v1510
    %v1948 = vunpack.c.l.b16 %v1511
    %v1949 = vunpack.c.h.b16 %v1511
    %v1950 = vunpack.c.l.b16 %v1512
    %v1951 = vunpack.c.h.b16 %v1512
    %v1952 = vunpack.c.l.b16 %v1513
    %v1953 = vunpack.c.l.b16 %v1514
    %v1954 = vunpack.c.h.b16 %v1514
    %v1955 = vunpack.c.l.b16 %v1515
    %v1956 = vunpack.c.h.b16 %v1515
    %v1957 = vunpack.c.l.b16 %v1516
    %v1958 = vunpack.c.l.b16 %v1517
    %v1959 = vunpack.c.h.b16 %v1517
    %v1960 = vunpack.c.l.b16 %v1518
    %v1961 = vunpack.c.h.b16 %v1518
    %v1962 = vunpack.c.l.b16 %v1519
    %v1963 = vunpack.c.l.b16 %v1520
    %v1964 = vunpack.c.h.b16 %v1520
    %v1965 = vunpack.c.l.b16 %v1521
    %v1966 = vunpack.c.h.b16 %v1521
    %v1967 = vunpack.c.l.b16 %v1522
    %v1968 = vunpack.c.l.b16 %v1523
    %v1969 = vunpack.c.h.b16 %v1523
    %v1970 = vunpack.c.l.b16 %v1524
    %v1971 = vunpack.c.h.b16 %v1524
    %v1972 = vunpack.c.l.b16 %v1525
    %v1973 = vunpack.c.l.b16 %v1526
    %v1974 = vunpack.c.h.b16 %v1526
    %v1975 = vunpack.c.l.b16 %v1527
    %v1976 = vunpack.c.h.b16 %v1527
    %v1977 = vunpack.c.l.b16 %v1528
    %v1978 = vunpack.c.l.b16 %v1529
    %v1979 = vunpack.c.h.b16 %v1529
    %v1980 = vunpack.c.l.b16 %v1530
    %v1981 = vunpack.c.h.b16 %v1530
    %v1982 = vunpack.c.l.b16 %v1531
    %v1983 = vunpack.c.l.b16 %v1532
    %v1984 = vunpack.c.h.b16 %v1532
    %v1985 = vunpack.c.l.b16 %v1533
    %v1986 = vunpack.c.h.b16 %v1533
    %v1987 = vunpack.c.l.b16 %v1534
    %v1988 = vunpack.c.l.b16 %v1535
    %v1989 = vunpack.c.h.b16 %v1535
    %v1990 = vunpack.c.l.b16 %v1536
    %v1991 = vunpack.c.h.b16 %v1536
    %v1992 = vunpack.c.l.b16 %v1537
    %v1993 = vunpack.c.l.b16 %v1538
    %v1994 = vunpack.c.h.b16 %v1538
    %v1995 = vunpack.c.l.b16 %v1539
    %v1996 = vunpack.c.h.b16 %v1539
    %v1997 = vunpack.c.l.b16 %v1540
    %v1998 = vunpack.c.l.b16 %v1541
    %v1999 = vunpack.c.h.b16 %v1541
    %v2000 = vunpack.c.l.b16 %v1542
    %v2001 = vunpack.c.h.b16 %v1542
    %v2002 = vunpack.c.l.b16 %v1543
    %v2003 = vunpack.c.l.b16 %v1544
    %v2004 = vunpack.c.h.b16 %v1544
    %v2005 = vunpack.c.l.b16 %v1545
    %v2006 = vunpack.c.h.b16 %v1545
    %v2007 = vunpack.c.l.b16 %v1546
    %v2008 = vunpack.c.l.b16 %v1547
    %v2009 = vunpack.c.h.b16 %v1547
    %v2010 = vunpack.c.l.b16 %v1548
    %v2011 = vunpack.c.h.b16 %v1548
    %v2012 = vunpack.c.l.b16 %v1549
    %v2013 = vunpack.c.l.b16 %v1550
    %v2014 = vunpack.c.h.b16 %v1550
    %v2015 = vunpack.c.l.b16 %v1551
    %v2016 = vunpack.c.h.b16 %v1551
    %v2017 = vunpack.c.l.b16 %v1552
    %v2018 = vunpack.c.l.b16 %v1553
    %v2019 = vunpack.c.h.b16 %v1553
    %v2020 = vunpack.c.l.b16 %v1554
    %v2021 = vunpack.c.h.b16 %v1554
    %v2022 = vunpack.c.l.b16 %v1555
    %v2023 = vunpack.c.l.b16 %v1556
    %v2024 = vunpack.c.h.b16 %v1556
    %v2025 = vunpack.c.l.b16 %v1557
    %v2026 = vunpack.c.h.b16 %v1557
    %v2027 = vunpack.c.l.b16 %v1558
    %v2028 = vunpack.c.l.b16 %v1559
    %v2029 = vunpack.c.h.b16 %v1559
    %v2030 = vunpack.c.l.b16 %v1560
    %v2031 = vunpack.c.h.b16 %v1560
    %v2032 = vunpack.c.l.b16 %v1561
    %v2033 = vunpack.c.l.b16 %v1562
    %v2034 = vunpack.c.h.b16 %v1562
    %v2035 = vunpack.c.l.b16 %v1563
    %v2036 = vunpack.c.h.b16 %v1563
    %v2037 = vunpack.c.l.b16 %v1564
    %v2038 = vunpack.c.l.b16 %v1565
    %v2039 = vunpack.c.h.b16 %v1565
    %v2040 = vunpack.c.l.b16 %v1566
    %v2041 = vunpack.c.h.b16 %v1566
    %v2042 = vunpack.c.l.b16 %v1567
    %v2043 = vunpack.c.l.b16 %v1568
    %v2044 = vunpack.c.h.b16 %v1568
    %v2045 = vunpack.c.l.b16 %v1569
    %v2046 = vunpack.c.h.b16 %v1569
    %v2047 = vunpack.c.l.b16 %v1570
    %v2048 = vunpack.c.l.b16 %v1571
    %v2049 = vunpack.c.h.b16 %v1571
    %v2050 = vunpack.c.l.b16 %v1572
    %v2051 = vunpack.c.h.b16 %v1572
    %v2052 = vunpack.c.l.b16 %v1573
    %v2053 = vunpack.c.l.b16 %v1574
    %v2054 = vunpack.c.h.b16 %v1574
    %v2055 = vunpack.c.l.b16 %v1575
    %v2056 = vunpack.c.h.b16 %v1575
    %v2057 = vunpack.c.l.b16 %v1576
    %v2058 = vunpack.c.l.b16 %v1577
    %v2059 = vunpack.c.h.b16 %v1577
    %v2060 = vunpack.c.l.b16 %v1578
    %v2061 = vunpack.c.h.b16 %v1578
    %v2062 = vunpack.c.l.b16 %v1579
    %v2063 = vunpack.c.l.b16 %v1580
    %v2064 = vunpack.c.h.b16 %v1580
    %v2065 = vunpack.c.l.b16 %v1581
    %v2066 = vunpack.c.h.b16 %v1581
    %v2067 = vunpack.c.l.b16 %v1582
    %v2068 = vunpack.c.l.b16 %v1583
    %v2069 = vunpack.c.h.b16 %v1583
    %v2070 = vunpack.c.l.b16 %v1584
    %v2071 = vunpack.c.h.b16 %v1584
    %v2072 = vunpack.c.l.b16 %v1585
    %v2073 = vunpack.c.l.b16 %v1586
    %v2074 = vunpack.c.h.b16 %v1586
    %v2075 = vunpack.c.l.b16 %v1587
    %v2076 = vunpack.c.h.b16 %v1587
    %v2077 = vunpack.c.l.b16 %v1588
    %v2078 = vunpack.c.l.b16 %v1589
    %v2079 = vunpack.c.h.b16 %v1589
    %v2080 = vunpack.c.l.b16 %v1590
    %v2081 = vunpack.c.h.b16 %v1590
    %v2082 = vunpack.c.l.b16 %v1591
    %v2083 = vunpack.c.l.b16 %v1592
    %v2084 = vunpack.c.h.b16 %v1592
    %v2085 = vunpack.c.l.b16 %v1593
    %v2086 = vunpack.c.h.b16 %v1593
    %v2087 = vunpack.c.l.b16 %v1594
    %v2088 = vunpack.c.l.b16 %v1595
    %v2089 = vunpack.c.h.b16 %v1595
    %v2090 = vunpack.c.l.b16 %v1596
    %v2091 = vunpack.c.h.b16 %v1596
    %v2092 = vunpack.c.l.b16 %v1597
    %v2093 = vunpack.c.l.b16 %v1598
    %v2094 = vunpack.c.h.b16 %v1598
    %v2095 = vunpack.c.l.b16 %v1599
    %v2096 = vunpack.c.h.b16 %v1599
    %v2097 = vunpack.c.l.b16 %v1600
    %v2098 = vunpack.c.l.b16 %v1601
    %v2099 = vunpack.c.h.b16 %v1601
    %v2100 = vunpack.c.l.b16 %v1602
    %v2101 = vunpack.c.h.b16 %v1602
    %v2102 = vunpack.c.l.b16 %v1603
    %v2103 = vunpack.c.l.b16 %v1604
    %v2104 = vunpack.c.h.b16 %v1604
    %v2105 = vunpack.c.l.b16 %v1605
    %v2106 = vunpack.c.h.b16 %v1605
    %v2107 = vunpack.c.l.b16 %v1606
    %v2108 = vunpack.c.l.b16 %v1607
    %v2109 = vunpack.c.h.b16 %v1607
    %v2110 = vunpack.c.l.b16 %v1608
    %v2111 = vunpack.c.h.b16 %v1608
    %v2112 = vunpack.c.l.b16 %v1609
    %v2113 = vunpack.c.l.b16 %v1610
    %v2114 = vunpack.c.h.b16 %v1610
    %v2115 = vunpack.c.l.b16 %v1611
    %v2116 = vunpack.c.h.b16 %v1611
    %v2117 = vunpack.c.l.b16 %v1612
    %v2118 = vunpack.c.l.b16 %v1613
    %v2119 = vunpack.c.h.b16 %v1613
    %v2120 = vunpack.c.l.b16 %v1614
    %v2121 = vunpack.c.h.b16 %v1614
    %v2122 = vunpack.c.l.b16 %v1615
    %v2123 = vunpack.c.l.b16 %v1616
    %v2124 = vunpack.c.h.b16 %v1616
    %v2125 = vunpack.c.l.b16 %v1617
    %v2126 = vunpack.c.h.b16 %v1617
    %v2127 = vunpack.c.l.b16 %v1618
    %v2128 = vunpack.c.l.b16 %v1619
    %v2129 = vunpack.c.h.b16 %v1619
    %v2130 = vunpack.c.l.b16 %v1620
    %v2131 = vunpack.c.h.b16 %v1620
    %v2132 = vunpack.c.l.b16 %v1621
    %v2133 = vunpack.c.l.b16 %v1622
    %v2134 = vunpack.c.h.b16 %v1622
    %v2135 = vunpack.c.l.b16 %v1623
    %v2136 = vunpack.c.h.b16 %v1623
    %v2137 = vunpack.c.l.b16 %v1624
    %v2138 = vunpack.c.l.b16 %v1625
    %v2139 = vunpack.c.h.b16 %v1625
    %v2140 = vunpack.c.l.b16 %v1626
    %v2141 = vunpack.c.h.b16 %v1626
    %v2142 = vunpack.c.l.b16 %v1627
    %v2143 = vunpack.c.l.b16 %v1628
    %v2144 = vunpack.c.h.b16 %v1628
    %v2145 = vunpack.c.l.b16 %v1629
    %v2146 = vunpack.c.h.b16 %v1629
    %v2147 = vunpack.c.l.b16 %v1630
    %v2148 = vunpack.c.l.b16 %v1631
    %v2149 = vunpack.c.h.b16 %v1631
    %v2150 = vunpack.c.l.b16 %v1632
    %v2151 = vunpack.c.h.b16 %v1632
    %v2152 = vunpack.c.l.b16 %v1633
    %v2153 = vunpack.c.l.b16 %v1634
    %v2154 = vunpack.c.h.b16 %v1634
    %v2155 = vunpack.c.l.b16 %v1635
    %v2156 = vunpack.c.h.b16 %v1635
    %v2157 = vunpack.c.l.b16 %v1636
    %v2158 = vunpack.c.l.b16 %v1637
    %v2159 = vunpack.c.h.b16 %v1637
    %v2160 = vunpack.c.l.b16 %v1638
    %v2161 = vunpack.c.h.b16 %v1638
    %v2162 = vunpack.c.l.b16 %v1639
    %v2163 = vunpack.c.l.b16 %v1640
    %v2164 = vunpack.c.h.b16 %v1640
    %v2165 = vunpack.c.l.b16 %v1641
    %v2166 = vunpack.c.h.b16 %v1641
    %v2167 = vunpack.c.l.b16 %v1642
    %v2168 = vunpack.c.l.b16 %v1643
    %v2169 = vunpack.c.h.b16 %v1643
    %v2170 = vunpack.c.l.b16 %v1644
    %v2171 = vunpack.c.h.b16 %v1644
    %v2172 = vunpack.c.l.b16 %v1645
    %v2173 = vunpack.c.l.b16 %v1646
    %v2174 = vunpack.c.h.b16 %v1646
    %v2175 = vunpack.c.l.b16 %v1647
    %v2176 = vunpack.c.h.b16 %v1647
    %v2177 = vunpack.c.l.b16 %v1648
    %v2178 = vunpack.c.l.b16 %v1649
    %v2179 = vunpack.c.h.b16 %v1649
    %v2180 = vunpack.c.l.b16 %v1650
    %v2181 = vunpack.c.h.b16 %v1650
    %v2182 = vunpack.c.l.b16 %v1651
    %v2183 = vunpack.c.l.b16 %v1652
    %v2184 = vunpack.c.h.b16 %v1652
    %v2185 = vunpack.c.l.b16 %v1653
    %v2186 = vunpack.c.h.b16 %v1653
    %v2187 = vunpack.c.l.b16 %v1654
    %v2188 = vunpack.c.l.b16 %v1655
    %v2189 = vunpack.c.h.b16 %v1655
    %v2190 = vunpack.c.l.b16 %v1656
    %v2191 = vunpack.c.h.b16 %v1656
    %v2192 = vunpack.c.l.b16 %v1657
    %v2193 = vunpack.c.l.b16 %v1658
    %v2194 = vunpack.c.h.b16 %v1658
    %v2195 = vunpack.c.l.b16 %v1659
    %v2196 = vunpack.c.h.b16 %v1659
    %v2197 = vunpack.c.l.b16 %v1660
    %v2198 = vunpack.c.l.b16 %v1661
    %v2199 = vunpack.c.h.b16 %v1661
    %v2200 = vunpack.c.l.b16 %v1662
    %v2201 = vunpack.c.h.b16 %v1662
    %v2202 = vunpack.c.l.b16 %v1663
    %v2203 = vpack.c.b16 %v1888, %v1883
    %v2204 = vpack.c.b16 %v1889, %v1884
    %v2205 = vpack.c.b16 %v1890, %v1885
    %v2206 = vpack.c.b16 %v1891, %v1886
    %v2207 = vpack.c.b16 %v1892, %v1887
    %v2208 = vpack.c.b16 %v1898, %v1893
    %v2209 = vpack.c.b16 %v1899, %v1894
    %v2210 = vpack.c.b16 %v1900, %v1895
    %v2211 = vpack.c.b16 %v1901, %v1896
    %v2212 = vpack.c.b16 %v1902, %v1897
    %v2213 = vpack.c.b16 %v1908, %v1903
    %v2214 = vpack.c.b16 %v1909, %v1904
    %v2215 = vpack.c.b16 %v1910, %v1905
    %v2216 = vpack.c.b16 %v1911, %v1906
    %v2217 = vpack.c.b16 %v1912, %v1907
    %v2218 = vpack.c.b16 %v1918, %v1913
    %v2219 = vpack.c.b16 %v1919, %v1914
    %v2220 = vpack.c.b16 %v1920, %v1915
    %v2221 = vpack.c.b16 %v1921, %v1916
    %v2222 = vpack.c.b16 %v1922, %v1917
    %v2223 = vpack.c.b16 %v1928, %v1923
    %v2224 = vpack.c.b16 %v1929, %v1924
    %v2225 = vpack.c.b16 %v1930, %v1925
    %v2226 = vpack.c.b16 %v1931, %v1926
    %v2227 = vpack.c.b16 %v1932, %v1927
    %v2228 = vpack.c.b16 %v1938, %v1933
    %v2229 = vpack.c.b16 %v1939, %v1934
    %v2230 = vpack.c.b16 %v1940, %v1935
    %v2231 = vpack.c.b16 %v1941, %v1936
    %v2232 = vpack.c.b16 %v1942, %v1937
    %v2233 = vpack.c.b16 %v1948, %v1943
    %v2234 = vpack.c.b16 %v1949, %v1944
    %v2235 = vpack.c.b16 %v1950, %v1945
    %v2236 = vpack.c.b16 %v1951, %v1946
    %v2237 = vpack.c.b16 %v1952, %v1947
    %v2238 = vpack.c.b16 %v1958, %v1953
    %v2239 = vpack.c.b16 %v1959, %v1954
    %v2240 = vpack.c.b16 %v1960, %v1955
    %v2241 = vpack.c.b16 %v1961, %v1956
    %v2242 = vpack.c.b16 %v1962, %v1957
    %v2243 = vpack.c.b16 %v1968, %v1963
    %v2244 = vpack.c.b16 %v1969, %v1964
    %v2245 = vpack.c.b16 %v1970, %v1965
    %v2246 = vpack.c.b16 %v1971, %v1966
    %v2247 = vpack.c.b16 %v1972, %v1967
    %v2248 = vpack.c.b16 %v1978, %v1973
    %v2249 = vpack.c.b16 %v1979, %v1974
    %v2250 = vpack.c.b16 %v1980, %v1975
    %v2251 = vpack.c.b16 %v1981, %v1976
    %v2252 = vpack.c.b16 %v1982, %v1977
    %v2253 = vpack.c.b16 %v1988, %v1983
    %v2254 = vpack.c.b16 %v1989, %v1984
    %v2255 = vpack.c.b16 %v1990, %v1985
    %v2256 = vpack.c.b16 %v1991, %v1986
    %v2257 = vpack.c.b16 %v1992, %v1987
    %v2258 = vpack.c.b16 %v1998, %v1993
    %v2259 = vpack.c.b16 %v1999, %v1994
    %v2260 = vpack.c.b16 %v2000, %v1995
    %v2261 = vpack.c.b16 %v2001, %v1996
    %v2262 = vpack.c.b16 %v2002, %v1997
    %v2263 = vpack.c.b16 %v2008, %v2003
    %v2264 = vpack.c.b16 %v2009, %v2004
    %v2265 = vpack.c.b16 %v2010, %v2005
    %v2266 = vpack.c.b16 %v2011, %v2006
    %v2267 = vpack.c.b16 %v2012, %v2007
    %v2268 = vpack.c.b16 %v2018, %v2013
    %v2269 = vpack.c.b16 %v2019, %v2014
    %v2270 = vpack.c.b16 %v2020, %v2015
    %v2271 = vpack.c.b16 %v2021, %v2016
    %v2272 = vpack.c.b16 %v2022, %v2017
    %v2273 = vpack.c.b16 %v2028, %v2023
    %v2274 = vpack.c.b16 %v2029, %v2024
    %v2275 = vpack.c.b16 %v2030, %v2025
    %v2276 = vpack.c.b16 %v2031, %v2026
    %v2277 = vpack.c.b16 %v2032, %v2027
    %v2278 = vpack.c.b16 %v2038, %v2033
    %v2279 = vpack.c.b16 %v2039, %v2034
    %v2280 = vpack.c.b16 %v2040, %v2035
    %v2281 = vpack.c.b16 %v2041, %v2036
    %v2282 = vpack.c.b16 %v2042, %v2037
    %v2283 = vpack.c.b16 %v2048, %v2043
    %v2284 = vpack.c.b16 %v2049, %v2044
    %v2285 = vpack.c.b16 %v2050, %v2045
    %v2286 = vpack.c.b16 %v2051, %v2046
    %v2287 = vpack.c.b16 %v2052, %v2047
    %v2288 = vpack.c.b16 %v2058, %v2053
    %v2289 = vpack.c.b16 %v2059, %v2054
    %v2290 = vpack.c.b16 %v2060, %v2055
    %v2291 = vpack.c.b16 %v2061, %v2056
    %v2292 = vpack.c.b16 %v2062, %v2057
    %v2293 = vpack.c.b16 %v2068, %v2063
    %v2294 = vpack.c.b16 %v2069, %v2064
    %v2295 = vpack.c.b16 %v2070, %v2065
    %v2296 = vpack.c.b16 %v2071, %v2066
    %v2297 = vpack.c.b16 %v2072, %v2067
    %v2298 = vpack.c.b16 %v2078, %v2073
    %v2299 = vpack.c.b16 %v2079, %v2074
    %v2300 = vpack.c.b16 %v2080, %v2075
    %v2301 = vpack.c.b16 %v2081, %v2076
    %v2302 = vpack.c.b16 %v2082, %v2077
    %v2303 = vpack.c.b16 %v2088, %v2083
    %v2304 = vpack.c.b16 %v2089, %v2084
    %v2305 = vpack.c.b16 %v2090, %v2085
    %v2306 = vpack.c.b16 %v2091, %v2086
    %v2307 = vpack.c.b16 %v2092, %v2087
    %v2308 = vpack.c.b16 %v2098, %v2093
    %v2309 = vpack.c.b16 %v2099, %v2094
    %v2310 = vpack.c.b16 %v2100, %v2095
    %v2311 = vpack.c.b16 %v2101, %v2096
    %v2312 = vpack.c.b16 %v2102, %v2097
    %v2313 = vpack.c.b16 %v2108, %v2103
    %v2314 = vpack.c.b16 %v2109, %v2104
    %v2315 = vpack.c.b16 %v2110, %v2105
    %v2316 = vpack.c.b16 %v2111, %v2106
    %v2317 = vpack.c.b16 %v2112, %v2107
    %v2318 = vpack.c.b16 %v2118, %v2113
    %v2319 = vpack.c.b16 %v2119, %v2114
    %v2320 = vpack.c.b16 %v2120, %v2115
    %v2321 = vpack.c.b16 %v2121, %v2116
    %v2322 = vpack.c.b16 %v2122, %v2117
    %v2323 = vpack.c.b16 %v2128, %v2123
    %v2324 = vpack.c.b16 %v2129, %v2124
    %v2325 = vpack.c.b16 %v2130, %v2125
    %v2326 = vpack.c.b16 %v2131, %v2126
    %v2327 = vpack.c.b16 %v2132, %v2127
    %v2328 = vpack.c.b16 %v2138, %v2133
    %v2329 = vpack.c.b16 %v2139, %v2134
    %v2330 = vpack.c.b16 %v2140, %v2135
    %v2331 = vpack.c.b16 %v2141, %v2136
    %v2332 = vpack.c.b16 %v2142, %v2137
    %v2333 = vpack.c.b16 %v2148, %v2143
    %v2334 = vpack.c.b16 %v2149, %v2144
    %v2335 = vpack.c.b16 %v2150, %v2145
    %v2336 = vpack.c.b16 %v2151, %v2146
    %v2337 = vpack.c.b16 %v2152, %v2147
    %v2338 = vpack.c.b16 %v2158, %v2153
    %v2339 = vpack.c.b16 %v2159, %v2154
    %v2340 = vpack.c.b16 %v2160, %v2155
    %v2341 = vpack.c.b16 %v2161, %v2156
    %v2342 = vpack.c.b16 %v2162, %v2157
    %v2343 = vpack.c.b16 %v2168, %v2163
    %v2344 = vpack.c.b16 %v2169, %v2164
    %v2345 = vpack.c.b16 %v2170, %v2165
    %v2346 = vpack.c.b16 %v2171, %v2166
    %v2347 = vpack.c.b16 %v2172, %v2167
    %v2348 = vpack.c.b16 %v2178, %v2173
    %v2349 = vpack.c.b16 %v2179, %v2174
    %v2350 = vpack.c.b16 %v2180, %v2175
    %v2351 = vpack.c.b16 %v2181, %v2176
    %v2352 = vpack.c.b16 %v2182, %v2177
    %v2353 = vpack.c.b16 %v2188, %v2183
    %v2354 = vpack.c.b16 %v2189, %v2184
    %v2355 = vpack.c.b16 %v2190, %v2185
    %v2356 = vpack.c.b16 %v2191, %v2186
    %v2357 = vpack.c.b16 %v2192, %v2187
    %v2358 = vpack.c.b16 %v2198, %v2193
    %v2359 = vpack.c.b16 %v2199, %v2194
    %v2360 = vpack.c.b16 %v2200, %v2195
    %v2361 = vpack.c.b16 %v2201, %v2196
    %v2362 = vpack.c.b16 %v2202, %v2197
    %2523 = vmatprep.subr.bf16.mxu0 %v2239
    %2524 = vmatpush1.bf16.msra.mxu0 %v2238
    %2525 = vmatprep.subr.bf16.mxu0 %v2234
    %2526 = vmatpush1.bf16.msra.mxu0 %v2233
    %2527 = vmatprep.subr.bf16.mxu0 %v2229
    %2528 = vmatpush1.bf16.msra.mxu0 %v2228
    %2529 = vmatprep.subr.bf16.mxu0 %v2224
    %2530 = vmatpush1.bf16.msra.mxu0 %v2223
    %2531 = vmatprep.subr.bf16.mxu0 %v2219
    %2532 = vmatpush1.bf16.msra.mxu0 %v2218
    %2533 = vmatprep.subr.bf16.mxu0 %v2214
    %2534 = vmatpush1.bf16.msra.mxu0 %v2213
    %2535 = vmatprep.subr.bf16.mxu0 %v2209
    %2536 = vmatpush1.bf16.msra.mxu0 %v2208
    %2537 = vmatprep.subr.bf16.mxu0 %v2204
    %2538 = vmatpush1.bf16.msra.mxu0 %v2203
    %2539 = vmatprep.subr.bf16.mxu0 %v2279
    %2540 = vmatpush2.bf16.msra.mxu0 %v2278
    %2541 = vmatprep.subr.bf16.mxu0 %v2274
    %2542 = vmatpush2.bf16.msra.mxu0 %v2273
    %2543 = vmatprep.subr.bf16.mxu0 %v2269
    %2544 = vmatpush2.bf16.msra.mxu0 %v2268
    %2545 = vmatprep.subr.bf16.mxu0 %v2264
    %2546 = vmatpush2.bf16.msra.mxu0 %v2263
    %2547 = vmatprep.subr.bf16.mxu0 %v2259
    %2548 = vmatpush2.bf16.msra.mxu0 %v2258
    %2549 = vmatprep.subr.bf16.mxu0 %v2254
    %2550 = vmatpush2.bf16.msra.mxu0 %v2253
    %2551 = vmatprep.subr.bf16.mxu0 %v2249
    %2552 = vmatpush2.bf16.msra.mxu0 %v2248
    %2553 = vmatprep.subr.bf16.mxu0 %v2244
    %2554 = vmatpush2.bf16.msra.mxu0 %v2243
    %2555 = vmatprep.mubr.bf16.mxu0 %v1469
    %2556 = vmatmul.mubr.bf16.gmra.mxu0 %v1468
    %v2557 = vpop.f32.mrf.mxu0
    %v2558 = vadd.f32 %v1669, %v2557
    %v2559 = vpop.f32.mrf.mxu0
    %v2560 = vadd.f32 %v1673, %v2559
    %v2561 = vpop.f32.mrf.mxu0
    %v2562 = vpop.f32.mrf.mxu0
    %2563 = vdwg.mxu0
    %2564 = vmatprep.subr.bf16.mxu0 %v2319
    %2565 = vmatpush1.bf16.msra.mxu0 %v2318
    %2566 = vmatprep.subr.bf16.mxu0 %v2314
    %2567 = vmatpush1.bf16.msra.mxu0 %v2313
    %2568 = vmatprep.subr.bf16.mxu0 %v2309
    %2569 = vmatpush1.bf16.msra.mxu0 %v2308
    %2570 = vmatprep.subr.bf16.mxu0 %v2304
    %2571 = vmatpush1.bf16.msra.mxu0 %v2303
    %2572 = vmatprep.subr.bf16.mxu0 %v2299
    %2573 = vmatpush1.bf16.msra.mxu0 %v2298
    %2574 = vmatprep.subr.bf16.mxu0 %v2294
    %2575 = vmatpush1.bf16.msra.mxu0 %v2293
    %2576 = vmatprep.subr.bf16.mxu0 %v2289
    %2577 = vmatpush1.bf16.msra.mxu0 %v2288
    %2578 = vmatprep.subr.bf16.mxu0 %v2284
    %2579 = vmatpush1.bf16.msra.mxu0 %v2283
    %2580 = vmatprep.subr.bf16.mxu0 %v2359
    %2581 = vmatpush2.bf16.msra.mxu0 %v2358
    %2582 = vmatprep.subr.bf16.mxu0 %v2354
    %2583 = vmatpush2.bf16.msra.mxu0 %v2353
    %2584 = vmatprep.subr.bf16.mxu0 %v2349
    %2585 = vmatpush2.bf16.msra.mxu0 %v2348
    %2586 = vmatprep.subr.bf16.mxu0 %v2344
    %2587 = vmatpush2.bf16.msra.mxu0 %v2343
    %2588 = vmatprep.subr.bf16.mxu0 %v2339
    %2589 = vmatpush2.bf16.msra.mxu0 %v2338
    %2590 = vmatprep.subr.bf16.mxu0 %v2334
    %2591 = vmatpush2.bf16.msra.mxu0 %v2333
    %2592 = vmatprep.subr.bf16.mxu0 %v2329
    %2593 = vmatpush2.bf16.msra.mxu0 %v2328
    %2594 = vmatprep.subr.bf16.mxu0 %v2324
    %2595 = vmatpush2.bf16.msra.mxu0 %v2323
    %2596 = vmatprep.mubr.bf16.mxu0 %v1471
    %2597 = vmatmul.mubr.bf16.gmra.mxu0 %v1470
    %v2598 = vpop.f32.mrf.mxu0
    %v2599 = vadd.f32 %v2558, %v2598
    %v2600 = vpop.f32.mrf.mxu0
    %v2601 = vadd.f32 %v2560, %v2600
    %v2602 = vpop.f32.mrf.mxu0
    %v2603 = vpop.f32.mrf.mxu0
    %2604 = vdwg.mxu0
    %2605 = vmatprep.subr.bf16.mxu0 %v2241
    %2606 = vmatpush1.bf16.msra.mxu0 %v2240
    %2607 = vmatprep.subr.bf16.mxu0 %v2236
    %2608 = vmatpush1.bf16.msra.mxu0 %v2235
    %2609 = vmatprep.subr.bf16.mxu0 %v2231
    %2610 = vmatpush1.bf16.msra.mxu0 %v2230
    %2611 = vmatprep.subr.bf16.mxu0 %v2226
    %2612 = vmatpush1.bf16.msra.mxu0 %v2225
    %2613 = vmatprep.subr.bf16.mxu0 %v2221
    %2614 = vmatpush1.bf16.msra.mxu0 %v2220
    %2615 = vmatprep.subr.bf16.mxu0 %v2216
    %2616 = vmatpush1.bf16.msra.mxu0 %v2215
    %2617 = vmatprep.subr.bf16.mxu0 %v2211
    %2618 = vmatpush1.bf16.msra.mxu0 %v2210
    %2619 = vmatprep.subr.bf16.mxu0 %v2206
    %2620 = vmatpush1.bf16.msra.mxu0 %v2205
    %2621 = vmatprep.subr.bf16.mxu0 %v2281
    %2622 = vmatpush2.bf16.msra.mxu0 %v2280
    %2623 = vmatprep.subr.bf16.mxu0 %v2276
    %2624 = vmatpush2.bf16.msra.mxu0 %v2275
    %2625 = vmatprep.subr.bf16.mxu0 %v2271
    %2626 = vmatpush2.bf16.msra.mxu0 %v2270
    %2627 = vmatprep.subr.bf16.mxu0 %v2266
    %2628 = vmatpush2.bf16.msra.mxu0 %v2265
    %2629 = vmatprep.subr.bf16.mxu0 %v2261
    %2630 = vmatpush2.bf16.msra.mxu0 %v2260
    %2631 = vmatprep.subr.bf16.mxu0 %v2256
    %2632 = vmatpush2.bf16.msra.mxu0 %v2255
    %2633 = vmatprep.subr.bf16.mxu0 %v2251
    %2634 = vmatpush2.bf16.msra.mxu0 %v2250
    %2635 = vmatprep.subr.bf16.mxu0 %v2246
    %2636 = vmatpush2.bf16.msra.mxu0 %v2245
    %2637 = vmatprep.mubr.bf16.mxu0 %v1469
    %2638 = vmatmul.mubr.bf16.gmra.mxu0 %v1468
    %v2639 = vpop.f32.mrf.mxu0
    %v2640 = vadd.f32 %v1677, %v2639
    %v2641 = vpop.f32.mrf.mxu0
    %v2642 = vadd.f32 %v1681, %v2641
    %v2643 = vpop.f32.mrf.mxu0
    %v2644 = vpop.f32.mrf.mxu0
    %2645 = vdwg.mxu0
    %2646 = vmatprep.subr.bf16.mxu0 %v2321
    %2647 = vmatpush1.bf16.msra.mxu0 %v2320
    %2648 = vmatprep.subr.bf16.mxu0 %v2316
    %2649 = vmatpush1.bf16.msra.mxu0 %v2315
    %2650 = vmatprep.subr.bf16.mxu0 %v2311
    %2651 = vmatpush1.bf16.msra.mxu0 %v2310
    %2652 = vmatprep.subr.bf16.mxu0 %v2306
    %2653 = vmatpush1.bf16.msra.mxu0 %v2305
    %2654 = vmatprep.subr.bf16.mxu0 %v2301
    %2655 = vmatpush1.bf16.msra.mxu0 %v2300
    %2656 = vmatprep.subr.bf16.mxu0 %v2296
    %2657 = vmatpush1.bf16.msra.mxu0 %v2295
    %2658 = vmatprep.subr.bf16.mxu0 %v2291
    %2659 = vmatpush1.bf16.msra.mxu0 %v2290
    %2660 = vmatprep.subr.bf16.mxu0 %v2286
    %2661 = vmatpush1.bf16.msra.mxu0 %v2285
    %2662 = vmatprep.subr.bf16.mxu0 %v2361
    %2663 = vmatpush2.bf16.msra.mxu0 %v2360
    %2664 = vmatprep.subr.bf16.mxu0 %v2356
    %2665 = vmatpush2.bf16.msra.mxu0 %v2355
    %2666 = vmatprep.subr.bf16.mxu0 %v2351
    %2667 = vmatpush2.bf16.msra.mxu0 %v2350
    %2668 = vmatprep.subr.bf16.mxu0 %v2346
    %2669 = vmatpush2.bf16.msra.mxu0 %v2345
    %2670 = vmatprep.subr.bf16.mxu0 %v2341
    %2671 = vmatpush2.bf16.msra.mxu0 %v2340
    %2672 = vmatprep.subr.bf16.mxu0 %v2336
    %2673 = vmatpush2.bf16.msra.mxu0 %v2335
    %2674 = vmatprep.subr.bf16.mxu0 %v2331
    %2675 = vmatpush2.bf16.msra.mxu0 %v2330
    %2676 = vmatprep.subr.bf16.mxu0 %v2326
    %2677 = vmatpush2.bf16.msra.mxu0 %v2325
    %2678 = vmatprep.mubr.bf16.mxu0 %v1471
    %2679 = vmatmul.mubr.bf16.gmra.mxu0 %v1470
    %v2680 = vpop.f32.mrf.mxu0
    %v2681 = vadd.f32 %v2640, %v2680
    %v2682 = vpop.f32.mrf.mxu0
    %v2683 = vadd.f32 %v2642, %v2682
    %v2684 = vpop.f32.mrf.mxu0
    %v2685 = vpop.f32.mrf.mxu0
    %2686 = vdwg.mxu0
    %2687 = vmatprep.subr.bf16.mxu0 0
    %2688 = vmatpush1.bf16.msra.mxu0 %v2242
    %2689 = vmatprep.subr.bf16.mxu0 0
    %2690 = vmatpush1.bf16.msra.mxu0 %v2237
    %2691 = vmatprep.subr.bf16.mxu0 0
    %2692 = vmatpush1.bf16.msra.mxu0 %v2232
    %2693 = vmatprep.subr.bf16.mxu0 0
    %2694 = vmatpush1.bf16.msra.mxu0 %v2227
    %2695 = vmatprep.subr.bf16.mxu0 0
    %2696 = vmatpush1.bf16.msra.mxu0 %v2222
    %2697 = vmatprep.subr.bf16.mxu0 0
    %2698 = vmatpush1.bf16.msra.mxu0 %v2217
    %2699 = vmatprep.subr.bf16.mxu0 0
    %2700 = vmatpush1.bf16.msra.mxu0 %v2212
    %2701 = vmatprep.subr.bf16.mxu0 0
    %2702 = vmatpush1.bf16.msra.mxu0 %v2207
    %2703 = vmatprep.subr.bf16.mxu0 0
    %2704 = vmatpush2.bf16.msra.mxu0 %v2282
    %2705 = vmatprep.subr.bf16.mxu0 0
    %2706 = vmatpush2.bf16.msra.mxu0 %v2277
    %2707 = vmatprep.subr.bf16.mxu0 0
    %2708 = vmatpush2.bf16.msra.mxu0 %v2272
    %2709 = vmatprep.subr.bf16.mxu0 0
    %2710 = vmatpush2.bf16.msra.mxu0 %v2267
    %2711 = vmatprep.subr.bf16.mxu0 0
    %2712 = vmatpush2.bf16.msra.mxu0 %v2262
    %2713 = vmatprep.subr.bf16.mxu0 0
    %2714 = vmatpush2.bf16.msra.mxu0 %v2257
    %2715 = vmatprep.subr.bf16.mxu0 0
    %2716 = vmatpush2.bf16.msra.mxu0 %v2252
    %2717 = vmatprep.subr.bf16.mxu0 0
    %2718 = vmatpush2.bf16.msra.mxu0 %v2247
    %2719 = vmatprep.mubr.bf16.mxu0 %v1469
    %2720 = vmatmul.mubr.bf16.gmra.mxu0 %v1468
    %v2721 = vpop.f32.mrf.mxu0
    %v2722 = vadd.f32 %v1685, %v2721
    %v2723 = vpop.f32.mrf.mxu0
    %v2724 = vpop.f32.mrf.mxu0
    %v2725 = vpop.f32.mrf.mxu0
    %2726 = vdwg.mxu0
    %2727 = vmatprep.subr.bf16.mxu0 0
    %2728 = vmatpush1.bf16.msra.mxu0 %v2322
    %2729 = vmatprep.subr.bf16.mxu0 0
    %2730 = vmatpush1.bf16.msra.mxu0 %v2317
    %2731 = vmatprep.subr.bf16.mxu0 0
    %2732 = vmatpush1.bf16.msra.mxu0 %v2312
    %2733 = vmatprep.subr.bf16.mxu0 0
    %2734 = vmatpush1.bf16.msra.mxu0 %v2307
    %2735 = vmatprep.subr.bf16.mxu0 0
    %2736 = vmatpush1.bf16.msra.mxu0 %v2302
    %2737 = vmatprep.subr.bf16.mxu0 0
    %2738 = vmatpush1.bf16.msra.mxu0 %v2297
    %2739 = vmatprep.subr.bf16.mxu0 0
    %2740 = vmatpush1.bf16.msra.mxu0 %v2292
    %2741 = vmatprep.subr.bf16.mxu0 0
    %2742 = vmatpush1.bf16.msra.mxu0 %v2287
    %2743 = vmatprep.subr.bf16.mxu0 0
    %2744 = vmatpush2.bf16.msra.mxu0 %v2362
    %2745 = vmatprep.subr.bf16.mxu0 0
    %2746 = vmatpush2.bf16.msra.mxu0 %v2357
    %2747 = vmatprep.subr.bf16.mxu0 0
    %2748 = vmatpush2.bf16.msra.mxu0 %v2352
    %2749 = vmatprep.subr.bf16.mxu0 0
    %2750 = vmatpush2.bf16.msra.mxu0 %v2347
    %2751 = vmatprep.subr.bf16.mxu0 0
    %2752 = vmatpush2.bf16.msra.mxu0 %v2342
    %2753 = vmatprep.subr.bf16.mxu0 0
    %2754 = vmatpush2.bf16.msra.mxu0 %v2337
    %2755 = vmatprep.subr.bf16.mxu0 0
    %2756 = vmatpush2.bf16.msra.mxu0 %v2332
    %2757 = vmatprep.subr.bf16.mxu0 0
    %2758 = vmatpush2.bf16.msra.mxu0 %v2327
    %2759 = vmatprep.mubr.bf16.mxu0 %v1471
    %2760 = vmatmul.mubr.bf16.gmra.mxu0 %v1470
    %v2761 = vpop.f32.mrf.mxu0
    %v2762 = vadd.f32 %v2722, %v2761
    %v2763 = vpop.f32.mrf.mxu0
    %v2764 = vpop.f32.mrf.mxu0
    %v2765 = vpop.f32.mrf.mxu0
    %2766 = vdwg.mxu0
    %2767 = vst [vmem:[#allocation11] sm:$0xff] %v2599
    %2768 = vst [vmem:[#allocation11 + $0x8] sm:$0xff] %v2601
    %2769 = vst [vmem:[#allocation11 + $0x10] sm:$0xff] %v2681
    %2770 = vst [vmem:[#allocation11 + $0x18] sm:$0xff] %v2683
    %2771 = vst [vmem:[#allocation11 + $0x20] sm:$0xff] %v2762
    // Predicated region
    $region50: #{tpu_custom_call.1} parent=1 // pred_check
      _
    $region51: #{tpu_custom_call.1} parent=1 // pred_check_branch
      %2773 = sbr.rel (0) target = $region53
    $region52: #{tpu_custom_call.1} parent=1 // pred_region
      %s2775 = ssub.s32 640, 640
      %2776 = vsyncadd [#allocation4], %s2775
      %s2778 = sshll.u32 [#allocation11], 4
      %s2779 = int_to_ptr.vmem [resolvable:$true] %s2778
      %2781 = dma.vmem_to_hbm [thread:$0]  %s2779, 640, %s7, [#allocation4]
    $region53: #{tpu_custom_call.1} parent=1 // pred_fallthru
      _
    // Predicated region
    $region54: #{tpu_custom_call.1} parent=1 // pred_check
      _
    $region55: #{tpu_custom_call.1} parent=1 // pred_check_branch
      %2783 = sbr.rel (0) target = $region57
    $region56: #{tpu_custom_call.1} parent=1 // pred_region
      %2784 = dma.done [#allocation4], 640
    $region57: #{tpu_custom_call.1} parent=1 // pred_fallthru
      _
    %2785 = vsyncpa [#allocation3], 1
    %2786 = vsyncpa [#allocation6], 1
    %2787 = vsyncpa [#allocation9], 1
    %2788 = vsyncpa [#allocation4], 1

</llo_original>
